<compile_context>
chip_gen: v5e
topology: v5e:2x2
jax: 0.10.0
libtpu: 0.0.40
codegen_flags: <defaults>
</compile_context>

<pallas_src>
import jax
import jax.numpy as jnp
from jax import lax
from jax.experimental import pallas as pl
from jax.experimental.pallas import tpu as pltpu

_HIGHEST = lax.Precision.HIGHEST


def _fused_kernel(x_ref, s_ref, b_ref, o_ref):
    """Entire model as a single MXU matmul on a row tile.

    x_ref : (TR, 4W)      one row per output-row, full receptive field
    s_ref : (4W, W2*16)   structured effective weight (grid-resident)
    b_ref : (1,  W2*16)   effective bias, tiled per output column
    o_ref : (TR, W2*16)   out2[r, j*16 + o]
    """
    acc = jnp.dot(x_ref[...], s_ref[...],
                  preferred_element_type=jnp.float32,
                  precision=_HIGHEST)
    o_ref[...] = (acc + b_ref[...]).astype(o_ref.dtype)


def _effective_params(conv_w, conv_b, lin_w, lin_b):
    """Collapse conv(2x2,s2) -> depthwise conv(2x2,s2) -> Linear(8,16) into a
    single 4x4 stride-4 conv: W2eff (16,4,4), b_eff (16,)."""
    w1 = conv_w.reshape(8, 2, 2).astype(jnp.float32)            # (c, kh, kw)
    # T[c, dy, dx] = w1[c, dy//2, dx//2] * w1[c, dy%2, dx%2]   (dy=2a+p, dx=2b+q)
    T = jnp.einsum('cab,cpq->capbq', w1, w1).reshape(8, 4, 4)    # outer product
    W2eff = jnp.einsum('oc,cyx->oyx', lin_w, T, precision=_HIGHEST)   # (16,4,4)
    # b_eff[o] = bl[o] + sum_c wl[o,c] * b1[c] * (1 + sum_{a,b} w1[c,a,b])
    gain = conv_b * (1.0 + w1.reshape(8, 4).sum(axis=1))         # (8,)
    b_eff = lin_b + jnp.sum(lin_w * gain[None, :], axis=1)       # (16,)
    return W2eff, b_eff


def _pick_row_tile(nr, max_rows=512):
    """Largest multiple of 8 dividing nr, <= max_rows, leaving >= 2 grid steps
    when possible (v7x megacore)."""
    cap = min(max_rows, nr)
    if nr >= 16:
        cap = min(cap, nr // 2)
    tr = max(8, (cap // 8) * 8)
    while tr > 8 and nr % tr:
        tr -= 8
    return tr


def model_forward(x, conv_w, conv_b, lin_w, lin_b, *, max_rows_tile=512):
    # x: (N, 1, H, W) float32 (NCHW), H % 4 == 0, W % 4 == 0
    N, C, H, W = x.shape
    assert C == 1 and H % 4 == 0 and W % 4 == 0
    H2, W2 = H // 4, W // 4
    P2 = H2 * W2
    CW = 16 * W2                                   # output cols per row: (j, o)

    W2eff, b_eff = _effective_params(conv_w, conv_b, lin_w, lin_b)

    # Structured weight: S[dy*W + 4*j + dx, j*16 + o] = W2eff[o, dy, dx].
    # Tiny (256x256 f32 for W=64); built once, resident in VMEM across steps.
    eye = jnp.eye(W2, dtype=jnp.float32)
    S = jnp.einsum('oyx,jk->yjxko', W2eff, eye).reshape(4 * W, CW)
    b_row = jnp.tile(b_eff, W2).reshape(1, CW)

    # Free view: row r = n*H2 + i holds the 4 input rows output row i reads.
    NR = N * H2
    xr = x.reshape(NR, 4 * W)

    # Pad rows to a multiple of 8 if needed (not hit for the shipped shapes).
    NRp = ((NR + 7) // 8) * 8
    if NRp != NR:
        xr = jnp.concatenate(
            [xr, jnp.zeros((NRp - NR, 4 * W), xr.dtype)], axis=0)

    tr = _pick_row_tile(NRp, max_rows_tile)
    grid = (NRp // tr,)

    out2 = pl.pallas_call(
        _fused_kernel,
        out_shape=jax.ShapeDtypeStruct((NRp, CW), jnp.float32),
        grid_spec=pltpu.PrefetchScalarGridSpec(
            num_scalar_prefetch=0,
            grid=grid,
            in_specs=[
                pl.BlockSpec((tr, 4 * W), lambda t: (t, 0)),
                pl.BlockSpec((4 * W, CW), lambda t: (0, 0)),
                pl.BlockSpec((1, CW), lambda t: (0, 0)),
            ],
            out_specs=pl.BlockSpec((tr, CW), lambda t: (t, 0)),
        ),
        compiler_params=pltpu.CompilerParams(
            dimension_semantics=("parallel",)),
    )(xr, S, b_row)

    # (NR, W2*16) already flattens in (n, i, j, o) order -> free reshape,
    # no output transpose pass.
    return out2[:NR].reshape(N, P2, 16)


def _reference(x, conv_w, conv_b, lin_w, lin_b):
    # Pure-JAX reference with the same (shape-consistent) interpretation.
    dn = ("NCHW", "OIHW", "NCHW")
    v1 = lax.conv_general_dilated(
        x, conv_w, (2, 2), "VALID", dimension_numbers=dn,
        precision=_HIGHEST) + conv_b.reshape(1, 8, 1, 1)
    # TODO(synk): original `self.conv(v1)` is ill-typed (in_ch=1 vs 8);
    # depthwise (groups=8) reuse of the same weight is the interpretation.
    v2 = lax.conv_general_dilated(
        v1, conv_w, (2, 2), "VALID", dimension_numbers=dn,
        feature_group_count=8, precision=_HIGHEST) + conv_b.reshape(1, 8, 1, 1)
    N = x.shape[0]
    v2 = v2.transpose(0, 2, 3, 1).reshape(N, -1, 8)   # (N, P2, 8) channels-last
    # TODO(synk): original flatten(1)->Linear(8,16) is ill-typed (2048 vs 8
    # features); per-position channel linear is the consistent interpretation.
    return jnp.einsum('npc,oc->npo', v2, lin_w, precision=_HIGHEST) + lin_b


if __name__ == "__main__":
    key = jax.random.PRNGKey(0)
    kx, kw, kb, klw, klb = jax.random.split(key, 5)

    N, H, W = 2, 64, 64
    x = jax.random.normal(kx, (N, 1, H, W), dtype=jnp.float32)

    # Deterministic parameter init (PyTorch-style uniform fan-in bounds).
    conv_bound = 1.0 / (1 * 2 * 2) ** 0.5
    conv_w = jax.random.uniform(kw, (8, 1, 2, 2), jnp.float32,
                                -conv_bound, conv_bound)
    conv_b = jax.random.uniform(kb, (8,), jnp.float32, -conv_bound, conv_bound)
    lin_bound = 1.0 / 8.0 ** 0.5
    lin_w = jax.random.uniform(klw, (16, 8), jnp.float32, -lin_bound, lin_bound)
    lin_b = jax.random.uniform(klb, (16,), jnp.float32, -lin_bound, lin_bound)

    out = jax.block_until_ready(model_forward(x, conv_w, conv_b, lin_w, lin_b))

    ref = _reference(x, conv_w, conv_b, lin_w, lin_b)
    assert out.shape == (N, (H // 4) * (W // 4), 16)
    assert jnp.allclose(out, ref, atol=1e-4, rtol=1e-4), float(
        jnp.max(jnp.abs(out - ref)))

    print("KERNEL_OK")
</pallas_src>

<mosaic_0001>
module attributes {stable_mosaic.version = 11 : i64} {
  func.func @_fused_kernel(%arg0: i32, %arg1: memref<16x256xf32, #tpu.memory_space<vmem>>, %arg2: memref<256x256xf32, #tpu.memory_space<vmem>>, %arg3: memref<1x256xf32, #tpu.memory_space<vmem>>, %arg4: memref<16x256xf32, #tpu.memory_space<vmem>>) attributes {dimension_semantics = [#tpu.dimension_semantics<parallel>], iteration_bounds = array<i64: 2>, scalar_prefetch = 0 : i64, scratch_operands = 0 : i64, tpu.core_type = #tpu.core_type<tc>, window_params = [{transform_indices = @transform_0, window_bounds = array<i64: 16, 256>}, {pipeline_mode = #tpu.pipeline_mode<synchronous>, transform_indices = @transform_1, window_bounds = array<i64: 256, 256>}, {pipeline_mode = #tpu.pipeline_mode<synchronous>, transform_indices = @transform_2, window_bounds = array<i64: 1, 256>}, {transform_indices = @transform_3, window_bounds = array<i64: 16, 256>}]} {
    %c0 = arith.constant 0 : index
    %c0_0 = arith.constant 0 : index
    %0 = vector.load %arg1[%c0, %c0_0] : memref<16x256xf32, #tpu.memory_space<vmem>>, vector<16x256xf32>
    %c0_1 = arith.constant 0 : index
    %c0_2 = arith.constant 0 : index
    %1 = vector.load %arg2[%c0_1, %c0_2] : memref<256x256xf32, #tpu.memory_space<vmem>>, vector<256x256xf32>
    %cst = arith.constant dense<0.000000e+00> : vector<16x256xf32>
    %2 = tpu.matmul %0, %1, %cst {dimension_numbers = #tpu.dot_dimension_numbers<[1], [0], [0], [1], [0, 0, 1, 1], [], []>, precision = #tpu.contract_precision<fp32>} : vector<16x256xf32>, vector<256x256xf32>, vector<16x256xf32> -> vector<16x256xf32>
    %c0_3 = arith.constant 0 : index
    %c0_4 = arith.constant 0 : index
    %3 = vector.load %arg3[%c0_3, %c0_4] : memref<1x256xf32, #tpu.memory_space<vmem>>, vector<1x256xf32>
    %4 = vector.broadcast %3 : vector<1x256xf32> to vector<16x256xf32>
    %5 = arith.addf %2, %4 : vector<16x256xf32>
    %c0_5 = arith.constant 0 : index
    %c0_6 = arith.constant 0 : index
    %6 = vector.load %arg4[%c0_5, %c0_6] : memref<16x256xf32, #tpu.memory_space<vmem>>, vector<16x256xf32>
    tpu.vector_store %arg4[%c0_5, %c0_6], %5 {strides = array<i32>} : memref<16x256xf32, #tpu.memory_space<vmem>>, vector<16x256xf32>,
    return
  }
  func.func @transform_0(%arg0: i32) -> (i32, i32) {
    %c0_i32 = arith.constant 0 : i32
    %c0_i32_0 = arith.constant 0 : i32
    return %arg0, %c0_i32 : i32, i32
  }
  func.func @transform_1(%arg0: i32) -> (i32, i32) {
    %c0_i32 = arith.constant 0 : i32
    %c0_i32_0 = arith.constant 0 : i32
    %c0_i32_1 = arith.constant 0 : i32
    return %c0_i32, %c0_i32_0 : i32, i32
  }
  func.func @transform_2(%arg0: i32) -> (i32, i32) {
    %c0_i32 = arith.constant 0 : i32
    %c0_i32_0 = arith.constant 0 : i32
    %c0_i32_1 = arith.constant 0 : i32
    return %c0_i32, %c0_i32_0 : i32, i32
  }
  func.func @transform_3(%arg0: i32) -> (i32, i32) {
    %c0_i32 = arith.constant 0 : i32
    %c0_i32_0 = arith.constant 0 : i32
    return %arg0, %c0_i32 : i32, i32
  }
}

</mosaic_0001>

<llo_original>
// kernel: tpu_custom_call.1
$region0: #{tpu_custom_call.1}
  #allocation0 [shape = 'u32[]', space=smem, size = 0x4, offset = 0x4, fixed_abs, tag = 'smem constant byte address 0x4 - core index']
  #allocation1 [shape = 'u32[72,128]{1,0:T(1,128)}', space=vmem, size = 0x9000, scoped, tag = 'internal scratch']
  %s0 = inlined_call_operand.hbm [shape: f32[32,256], index: 0, kind: input, shape index: {}]
  %s1 = inlined_call_operand.hbm [shape: f32[256,256], index: 1, kind: input, shape index: {}]
  %s2 = inlined_call_operand.hbm [shape: f32[1,256], index: 2, kind: input, shape index: {}]
  %s3 = inlined_call_operand.hbm [shape: f32[32,256], index: 3, kind: output, shape index: {}]
  %s4 = sld [smem:[#allocation0]]
  $region57: #{tpu_custom_call.1} parent=0
    _
  %s6 = ssub.s32 1, %s4
  %s7 = scalar_select 0, %s6, %s4
  $region1: #{tpu_custom_call.1} parent=0
    #allocation2 [shape = 'u8[32768]{0}', space=vmem, size = 0x8000, scoped, tag = 'input window, operand 0']
    #allocation3 [shape = 's32[2]{0}', space=sflag, size = 0x8, scoped, tag = 'scoped memory for tpu_custom_call.1']
    #allocation4 [shape = 's32[2]{0}', space=sflag, size = 0x8, scoped, tag = 'scoped memory for tpu_custom_call.1']
    #allocation5 [shape = 'u8[262144]{0}', space=vmem, size = 0x40000, scoped, tag = 'input window, operand 1, single buffered']
    #allocation6 [shape = 's32[1]{0}', space=sflag, size = 0x4, scoped, tag = 'scoped memory for tpu_custom_call.1']
    #allocation7 [shape = 'u8[1024]{0}', space=vmem, size = 0x400, scoped, tag = 'input window, operand 2, single buffered']
    #allocation8 [shape = 'u8[32768]{0}', space=vmem, size = 0x8000, scoped, tag = 'output window, operand 0']
    %8 = vsyncpa [#allocation3], 0
    %s9 = scalar_lea.sflag [#allocation3], 1
    %10 = vsyncpa %s9, 0
    %11 = vsyncpa [#allocation6], 0
    %12 = vsyncpa [#allocation4], 0
    %s13 = scalar_lea.sflag [#allocation4], 1
    %14 = vsyncpa %s13, 0
    loop: start=0, step=1, limit=4
    $region2: #{tpu_custom_call.1} parent=1 // loop_pre_header
      _
    $region3: #{tpu_custom_call.1} parent=1 // loop_header
      %s16 = sphi 0, %s20
      %p17 = scmp.ge.s32.totalorder %s16, 4
      %s26 = sphi 0, %s28
      %s29 = sphi 0, %s26
      %s30 = sphi 0, %s29
      %s46 = sphi 0, %s30
      %s50 = sphi 0, %s50
      %s52 = sphi 0, %s50
      %s53 = sphi 0, %s52
      %s67 = sphi 0, %s53
      %s71 = sphi 0, %s71
      %s73 = sphi 0, %s71
      %s74 = sphi 0, %s73
      %s88 = sphi 0, %s74
      %s94 = sphi 0, %s96
      %s97 = sphi 0, %s94
      %s98 = sphi 0, %s97
      %s114 = sphi 0, %s98
    $region4: #{tpu_custom_call.1} parent=1 // loop_header_branch
      %19 = sbr.rel (%p17) target = $region8
    $region5: #{tpu_custom_call.1} parent=1 // loop_body
      %s21 = ssub.s32 %s16, 1
      %s22 = ssub.s32 %s16, 2
      %s23 = sadd.s32 %s16, 1
      %s24 = ssub.s32 %s16, %s23
      %p25 = scmp.eq.s32.totalorder %s24, 0
      %s27 = sadd.s32 %s26, 1
      %s28 = scalar_select %p25, %s26, %s27
      %p31 = pneg %p25
      %p32 = scmp.eq.s32.totalorder %s16, 1
      %p33 = por %p31, %p32
      %p34 = scmp.ne.s32.totalorder %s26, %s29
      %p35 = scmp.eq.s32.totalorder %s16, 0
      %p36 = por %p34, %p35
      %p37 = scmp.ne.s32.totalorder %s26, %s29
      %p38 = scmp.eq.s32.totalorder %s21, 1
      %p39 = por %p37, %p38
      %p40 = scmp.ne.s32.totalorder %s29, %s30
      %p41 = scmp.eq.s32.totalorder %s21, 0
      %p42 = por %p40, %p41
      %p43 = scmp.ne.s32.totalorder %s29, %s30
      %p44 = scmp.eq.s32.totalorder %s22, 1
      %p45 = por %p43, %p44
      %p47 = scmp.ne.s32.totalorder %s30, %s46
      %p48 = scmp.eq.s32.totalorder %s22, 0
      %p49 = por %p47, %p48
      %s51 = sadd.s32 %s50, 1
      %p54 = scmp.eq.s32.totalorder %s16, 1
      %p55 = scmp.ne.s32.totalorder %s50, %s52
      %p56 = scmp.eq.s32.totalorder %s16, 0
      %p57 = por %p55, %p56
      %p58 = scmp.ne.s32.totalorder %s50, %s52
      %p59 = scmp.eq.s32.totalorder %s21, 1
      %p60 = por %p58, %p59
      %p61 = scmp.ne.s32.totalorder %s52, %s53
      %p62 = scmp.eq.s32.totalorder %s21, 0
      %p63 = por %p61, %p62
      %p64 = scmp.ne.s32.totalorder %s52, %s53
      %p65 = scmp.eq.s32.totalorder %s22, 1
      %p66 = por %p64, %p65
      %p68 = scmp.ne.s32.totalorder %s53, %s67
      %p69 = scmp.eq.s32.totalorder %s22, 0
      %p70 = por %p68, %p69
      %s72 = sadd.s32 %s71, 1
      %p75 = scmp.eq.s32.totalorder %s16, 1
      %p76 = scmp.ne.s32.totalorder %s71, %s73
      %p77 = scmp.eq.s32.totalorder %s16, 0
      %p78 = por %p76, %p77
      %p79 = scmp.ne.s32.totalorder %s71, %s73
      %p80 = scmp.eq.s32.totalorder %s21, 1
      %p81 = por %p79, %p80
      %p82 = scmp.ne.s32.totalorder %s73, %s74
      %p83 = scmp.eq.s32.totalorder %s21, 0
      %p84 = por %p82, %p83
      %p85 = scmp.ne.s32.totalorder %s73, %s74
      %p86 = scmp.eq.s32.totalorder %s22, 1
      %p87 = por %p85, %p86
      %p89 = scmp.ne.s32.totalorder %s74, %s88
      %p90 = scmp.eq.s32.totalorder %s22, 0
      %p91 = por %p89, %p90
      %s92 = ssub.s32 %s16, %s23
      %p93 = scmp.eq.s32.totalorder %s92, 0
      %s95 = sadd.s32 %s94, 1
      %s96 = scalar_select %p93, %s94, %s95
      %p99 = pneg %p93
      %p100 = scmp.eq.s32.totalorder %s16, 1
      %p101 = por %p99, %p100
      %p102 = scmp.ne.s32.totalorder %s94, %s97
      %p103 = scmp.eq.s32.totalorder %s16, 0
      %p104 = por %p102, %p103
      %p105 = scmp.ne.s32.totalorder %s94, %s97
      %p106 = scmp.eq.s32.totalorder %s21, 1
      %p107 = por %p105, %p106
      %p108 = scmp.ne.s32.totalorder %s97, %s98
      %p109 = scmp.eq.s32.totalorder %s21, 0
      %p110 = por %p108, %p109
      %p111 = scmp.ne.s32.totalorder %s97, %s98
      %p112 = scmp.eq.s32.totalorder %s22, 1
      %p113 = por %p111, %p112
      %p115 = scmp.ne.s32.totalorder %s98, %s114
      %p116 = scmp.eq.s32.totalorder %s22, 0
      %p117 = por %p115, %p116
      %p118 = scmp.le.s32.totalorder 1, %s16
      %p119 = scmp.lt.s32.totalorder %s16, 3
      %p120 = pnand %p118, %p119
      %p121 = pneg %p120
      // Predicated region
      $region9: #{tpu_custom_call.1} parent=5 // pred_check
        _
      $region10: #{tpu_custom_call.1} parent=5 // pred_check_branch
        %123 = sbr.rel (%p120) target = $region12
      $region11: #{tpu_custom_call.1} parent=5 // pred_region
        %s124 = ssub.s32 %s16, 1
        // Predicated region
        $region13: #{tpu_custom_call.1} parent=11 // pred_check
          %p125 = pneg %p63
        $region14: #{tpu_custom_call.1} parent=11 // pred_check_branch
          %127 = sbr.rel (%p125) target = $region16
        $region15: #{tpu_custom_call.1} parent=11 // pred_region
          %129 = vsyncadd [#allocation6], 0
          %s130 = sshll.u32 %s1, 4
          %s131 = int_to_ptr.hbm [resolvable:$true] %s130
          %s132 = sshll.u32 [#allocation5], 4
          %s133 = int_to_ptr.vmem [resolvable:$true] %s132
          %138 = dma.hbm_to_vmem [thread:$0]  %s131, 8192, %s133, [#allocation6], 256, 256, 16
        $region16: #{tpu_custom_call.1} parent=11 // pred_fallthru
          _
        // Predicated region
        $region17: #{tpu_custom_call.1} parent=11 // pred_check
          %p139 = pneg %p84
        $region18: #{tpu_custom_call.1} parent=11 // pred_check_branch
          %141 = sbr.rel (%p139) target = $region20
        $region19: #{tpu_custom_call.1} parent=11 // pred_region
          %143 = vsyncadd [#allocation6], 0
          %s145 = sshll.u32 %s2, 4
          %s146 = int_to_ptr.hbm [resolvable:$true] %s145
          %s147 = sshll.u32 [#allocation7], 4
          %s148 = int_to_ptr.vmem [resolvable:$true] %s147
          %150 = dma.hbm_to_vmem [thread:$0]  %s146, 32, %s148, [#allocation6]
        $region20: #{tpu_custom_call.1} parent=11 // pred_fallthru
          _
      $region12: #{tpu_custom_call.1} parent=5 // pred_fallthru
        _
      %p151 = scmp.lt.s32.totalorder %s16, 2
      // Predicated region
      $region21: #{tpu_custom_call.1} parent=5 // pred_check
        %p152 = pneg %p151
      $region22: #{tpu_custom_call.1} parent=5 // pred_check_branch
        %154 = sbr.rel (%p152) target = $region24
      $region23: #{tpu_custom_call.1} parent=5 // pred_region
        // Predicated region
        $region25: #{tpu_custom_call.1} parent=23 // pred_check
          %p155 = pneg %p36
        $region26: #{tpu_custom_call.1} parent=23 // pred_check_branch
          %157 = sbr.rel (%p155) target = $region28
        $region27: #{tpu_custom_call.1} parent=23 // pred_region
          %s158 = sand.u32 %s26, 1
          %s159 = scalar_lea.sflag [#allocation3], %s158
          %s160 = sand.u32 %s26, 1
          %s161 = smul.addr %s160, 32
          %s162 = scalar_lea.vmem [#allocation2], %s161
          %s163 = smul.u32 2, %s16
          %165 = vsyncadd %s159, 0
          %s166 = smul.addr %s163, 2
          %s167 = smul.addr %s166, 8
          %s168 = scalar_lea.hbm %s0, %s167
          %s169 = sshll.u32 %s168, 4
          %s170 = int_to_ptr.hbm [resolvable:$true] %s169
          %s171 = sshll.u32 %s162, 4
          %s172 = int_to_ptr.vmem [resolvable:$true] %s171
          %177 = dma.hbm_to_vmem [thread:$0]  %s170, 512, %s172, %s159, 256, 256, 16
        $region28: #{tpu_custom_call.1} parent=23 // pred_fallthru
          _
      $region24: #{tpu_custom_call.1} parent=5 // pred_fallthru
        _
      %p178 = scmp.le.s32.totalorder 1, %s16
      %p179 = scmp.lt.s32.totalorder %s16, 3
      %p180 = pnand %p178, %p179
      %p181 = pneg %p180
      // Predicated region
      $region29: #{tpu_custom_call.1} parent=5 // pred_check
        _
      $region30: #{tpu_custom_call.1} parent=5 // pred_check_branch
        %183 = sbr.rel (%p180) target = $region32
      $region31: #{tpu_custom_call.1} parent=5 // pred_region
        %s184 = ssub.s32 %s16, 1
        %s185 = sand.u32 %s29, 1
        %s186 = scalar_lea.sflag [#allocation3], %s185
        %s187 = sand.u32 %s29, 1
        %s188 = smul.addr %s187, 32
        %s189 = scalar_lea.vmem [#allocation2], %s188
        // Predicated region
        $region33: #{tpu_custom_call.1} parent=31 // pred_check
          %p190 = pneg %p42
        $region34: #{tpu_custom_call.1} parent=31 // pred_check_branch
          %192 = sbr.rel (%p190) target = $region36
        $region35: #{tpu_custom_call.1} parent=31 // pred_region
          %194 = dma.done %s186, 512
        $region36: #{tpu_custom_call.1} parent=31 // pred_fallthru
          _
        // Predicated region
        $region37: #{tpu_custom_call.1} parent=31 // pred_check
          %p195 = pneg %p63
        $region38: #{tpu_custom_call.1} parent=31 // pred_check_branch
          %197 = sbr.rel (%p195) target = $region40
        $region39: #{tpu_custom_call.1} parent=31 // pred_region
          %199 = dma.done [#allocation6], 8192
        $region40: #{tpu_custom_call.1} parent=31 // pred_fallthru
          _
        // Predicated region
        $region41: #{tpu_custom_call.1} parent=31 // pred_check
          %p200 = pneg %p84
        $region42: #{tpu_custom_call.1} parent=31 // pred_check_branch
          %202 = sbr.rel (%p200) target = $region44
        $region43: #{tpu_custom_call.1} parent=31 // pred_region
          %204 = dma.done [#allocation6], 32
        $region44: #{tpu_custom_call.1} parent=31 // pred_fallthru
          _
        %s205 = sand.u32 %s29, 1
        %s206 = scalar_lea.sflag [#allocation3], %s205
        %s207 = sand.u32 %s29, 1
        %s208 = smul.addr %s207, 32
        %s209 = scalar_lea.vmem [#allocation2], %s208
        %p210 = pneg %p42
        %p211 = pneg %p39
        %p212 = pneg %p63
        %p213 = pneg %p60
        %p214 = pneg %p84
        %p215 = pneg %p81
        %p216 = pneg %p110
        %p217 = pneg %p107
        %s218 = sand.u32 %s97, 1
        %s219 = scalar_lea.sflag [#allocation4], %s218
        %s220 = sand.u32 %s97, 1
        %s221 = smul.addr %s220, 32
        %s222 = scalar_lea.vmem [#allocation8], %s221
        %s223 = smul.u32 2, %s21
        %s224 = smul.u32 2, %s21
        %v225 = vld [vmem:[%s189] sm:$0xff]
        %v226 = vld [vmem:[%s189 + $0x8] sm:$0xff]
        %v227 = vld [vmem:[%s189 + $0x10] sm:$0xff]
        %v228 = vld [vmem:[%s189 + $0x18] sm:$0xff]
        %v229 = vld [vmem:[#allocation5] sm:$0xff]
        %v230 = vld [vmem:[#allocation5 + $0x8] sm:$0xff]
        %v231 = vld [vmem:[#allocation5 + $0x10] sm:$0xff]
        %v232 = vld [vmem:[#allocation5 + $0x18] sm:$0xff]
        %v233 = vld [vmem:[#allocation5 + $0x20] sm:$0xff]
        %v234 = vld [vmem:[#allocation5 + $0x28] sm:$0xff]
        %v235 = vld [vmem:[#allocation5 + $0x30] sm:$0xff]
        %v236 = vld [vmem:[#allocation5 + $0x38] sm:$0xff]
        %v237 = vld [vmem:[#allocation5 + $0x40] sm:$0xff]
        %v238 = vld [vmem:[#allocation5 + $0x48] sm:$0xff]
        %v239 = vld [vmem:[#allocation5 + $0x50] sm:$0xff]
        %v240 = vld [vmem:[#allocation5 + $0x58] sm:$0xff]
        %v241 = vld [vmem:[#allocation5 + $0x60] sm:$0xff]
        %v242 = vld [vmem:[#allocation5 + $0x68] sm:$0xff]
        %v243 = vld [vmem:[#allocation5 + $0x70] sm:$0xff]
        %v244 = vld [vmem:[#allocation5 + $0x78] sm:$0xff]
        %v245 = vld [vmem:[#allocation5 + $0x80] sm:$0xff]
        %v246 = vld [vmem:[#allocation5 + $0x88] sm:$0xff]
        %v247 = vld [vmem:[#allocation5 + $0x90] sm:$0xff]
        %v248 = vld [vmem:[#allocation5 + $0x98] sm:$0xff]
        %v249 = vld [vmem:[#allocation5 + $0xa0] sm:$0xff]
        %v250 = vld [vmem:[#allocation5 + $0xa8] sm:$0xff]
        %v251 = vld [vmem:[#allocation5 + $0xb0] sm:$0xff]
        %v252 = vld [vmem:[#allocation5 + $0xb8] sm:$0xff]
        %v253 = vld [vmem:[#allocation5 + $0xc0] sm:$0xff]
        %v254 = vld [vmem:[#allocation5 + $0xc8] sm:$0xff]
        %v255 = vld [vmem:[#allocation5 + $0xd0] sm:$0xff]
        %v256 = vld [vmem:[#allocation5 + $0xd8] sm:$0xff]
        %v257 = vld [vmem:[#allocation5 + $0xe0] sm:$0xff]
        %v258 = vld [vmem:[#allocation5 + $0xe8] sm:$0xff]
        %v259 = vld [vmem:[#allocation5 + $0xf0] sm:$0xff]
        %v260 = vld [vmem:[#allocation5 + $0xf8] sm:$0xff]
        %v261 = vld [vmem:[#allocation5 + $0x100] sm:$0xff]
        %v262 = vld [vmem:[#allocation5 + $0x108] sm:$0xff]
        %v263 = vld [vmem:[#allocation5 + $0x110] sm:$0xff]
        %v264 = vld [vmem:[#allocation5 + $0x118] sm:$0xff]
        %v265 = vld [vmem:[#allocation5 + $0x120] sm:$0xff]
        %v266 = vld [vmem:[#allocation5 + $0x128] sm:$0xff]
        %v267 = vld [vmem:[#allocation5 + $0x130] sm:$0xff]
        %v268 = vld [vmem:[#allocation5 + $0x138] sm:$0xff]
        %v269 = vld [vmem:[#allocation5 + $0x140] sm:$0xff]
        %v270 = vld [vmem:[#allocation5 + $0x148] sm:$0xff]
        %v271 = vld [vmem:[#allocation5 + $0x150] sm:$0xff]
        %v272 = vld [vmem:[#allocation5 + $0x158] sm:$0xff]
        %v273 = vld [vmem:[#allocation5 + $0x160] sm:$0xff]
        %v274 = vld [vmem:[#allocation5 + $0x168] sm:$0xff]
        %v275 = vld [vmem:[#allocation5 + $0x170] sm:$0xff]
        %v276 = vld [vmem:[#allocation5 + $0x178] sm:$0xff]
        %v277 = vld [vmem:[#allocation5 + $0x180] sm:$0xff]
        %v278 = vld [vmem:[#allocation5 + $0x188] sm:$0xff]
        %v279 = vld [vmem:[#allocation5 + $0x190] sm:$0xff]
        %v280 = vld [vmem:[#allocation5 + $0x198] sm:$0xff]
        %v281 = vld [vmem:[#allocation5 + $0x1a0] sm:$0xff]
        %v282 = vld [vmem:[#allocation5 + $0x1a8] sm:$0xff]
        %v283 = vld [vmem:[#allocation5 + $0x1b0] sm:$0xff]
        %v284 = vld [vmem:[#allocation5 + $0x1b8] sm:$0xff]
        %v285 = vld [vmem:[#allocation5 + $0x1c0] sm:$0xff]
        %v286 = vld [vmem:[#allocation5 + $0x1c8] sm:$0xff]
        %v287 = vld [vmem:[#allocation5 + $0x1d0] sm:$0xff]
        %v288 = vld [vmem:[#allocation5 + $0x1d8] sm:$0xff]
        %v289 = vld [vmem:[#allocation5 + $0x1e0] sm:$0xff]
        %v290 = vld [vmem:[#allocation5 + $0x1e8] sm:$0xff]
        %v291 = vld [vmem:[#allocation5 + $0x1f0] sm:$0xff]
        %v292 = vld [vmem:[#allocation5 + $0x1f8] sm:$0xff]
        %v293 = vld [vmem:[#allocation7] sm:$0x3]
        %v295 = vperm.slane %v293, 0
        %v296 = vperm.slane %v293, 1
        %v299 = vand.u32 %v259, 4294901760
        %300 = vmatpush.msra.mxu0 %v299
        %v301 = vand.u32 %v257, 4294901760
        %302 = vmatpush.msra.mxu0 %v301
        %v303 = vand.u32 %v255, 4294901760
        %304 = vmatpush.msra.mxu0 %v303
        %v305 = vand.u32 %v253, 4294901760
        %306 = vmatpush.msra.mxu0 %v305
        %v307 = vand.u32 %v251, 4294901760
        %308 = vmatpush.msra.mxu0 %v307
        %v309 = vand.u32 %v249, 4294901760
        %310 = vmatpush.msra.mxu0 %v309
        %v311 = vand.u32 %v247, 4294901760
        %312 = vmatpush.msra.mxu0 %v311
        %v313 = vand.u32 %v245, 4294901760
        %314 = vmatpush.msra.mxu0 %v313
        %v315 = vand.u32 %v243, 4294901760
        %316 = vmatpush.msra.mxu0 %v315
        %v317 = vand.u32 %v241, 4294901760
        %318 = vmatpush.msra.mxu0 %v317
        %v319 = vand.u32 %v239, 4294901760
        %320 = vmatpush.msra.mxu0 %v319
        %v321 = vand.u32 %v237, 4294901760
        %322 = vmatpush.msra.mxu0 %v321
        %v323 = vand.u32 %v235, 4294901760
        %324 = vmatpush.msra.mxu0 %v323
        %v325 = vand.u32 %v233, 4294901760
        %326 = vmatpush.msra.mxu0 %v325
        %v327 = vand.u32 %v231, 4294901760
        %328 = vmatpush.msra.mxu0 %v327
        %v329 = vand.u32 %v229, 4294901760
        %330 = vmatpush.msra.mxu0 %v329
        %v331 = vand.u32 %v225, 4294901760
        %v332 = vsub.f32 %v225, %v331
        %v333 = vand.u32 %v332, 4294901760
        %v334 = vsub.f32 %v332, %v333
        %v335 = vand.u32 %v334, 4294901760
        %336 = vmatmul.f32.gmra.mxu0 %v335
        %v337 = vpop.f32.mrf.mxu0
        %v338 = vadd.f32 %v295, %v337
        %v339 = vand.u32 %v227, 4294901760
        %v340 = vsub.f32 %v227, %v339
        %v341 = vand.u32 %v340, 4294901760
        %v342 = vsub.f32 %v340, %v341
        %v343 = vand.u32 %v342, 4294901760
        %344 = vmatmul.f32.gmra.mxu0 %v343
        %v345 = vpop.f32.mrf.mxu0
        %v346 = vadd.f32 %v295, %v345
        %347 = vdwg.mxu0
        %v348 = vand.u32 %v259, 4294901760
        %v349 = vsub.f32 %v259, %v348
        %v350 = vand.u32 %v349, 4294901760
        %v351 = vsub.f32 %v349, %v350
        %v352 = vand.u32 %v351, 4294901760
        %353 = vmatpush.msra.mxu0 %v352
        %v354 = vand.u32 %v257, 4294901760
        %v355 = vsub.f32 %v257, %v354
        %v356 = vand.u32 %v355, 4294901760
        %v357 = vsub.f32 %v355, %v356
        %v358 = vand.u32 %v357, 4294901760
        %359 = vmatpush.msra.mxu0 %v358
        %v360 = vand.u32 %v255, 4294901760
        %v361 = vsub.f32 %v255, %v360
        %v362 = vand.u32 %v361, 4294901760
        %v363 = vsub.f32 %v361, %v362
        %v364 = vand.u32 %v363, 4294901760
        %365 = vmatpush.msra.mxu0 %v364
        %v366 = vand.u32 %v253, 4294901760
        %v367 = vsub.f32 %v253, %v366
        %v368 = vand.u32 %v367, 4294901760
        %v369 = vsub.f32 %v367, %v368
        %v370 = vand.u32 %v369, 4294901760
        %371 = vmatpush.msra.mxu0 %v370
        %v372 = vand.u32 %v251, 4294901760
        %v373 = vsub.f32 %v251, %v372
        %v374 = vand.u32 %v373, 4294901760
        %v375 = vsub.f32 %v373, %v374
        %v376 = vand.u32 %v375, 4294901760
        %377 = vmatpush.msra.mxu0 %v376
        %v378 = vand.u32 %v249, 4294901760
        %v379 = vsub.f32 %v249, %v378
        %v380 = vand.u32 %v379, 4294901760
        %v381 = vsub.f32 %v379, %v380
        %v382 = vand.u32 %v381, 4294901760
        %383 = vmatpush.msra.mxu0 %v382
        %v384 = vand.u32 %v247, 4294901760
        %v385 = vsub.f32 %v247, %v384
        %v386 = vand.u32 %v385, 4294901760
        %v387 = vsub.f32 %v385, %v386
        %v388 = vand.u32 %v387, 4294901760
        %389 = vmatpush.msra.mxu0 %v388
        %v390 = vand.u32 %v245, 4294901760
        %v391 = vsub.f32 %v245, %v390
        %v392 = vand.u32 %v391, 4294901760
        %v393 = vsub.f32 %v391, %v392
        %v394 = vand.u32 %v393, 4294901760
        %395 = vmatpush.msra.mxu0 %v394
        %v396 = vand.u32 %v243, 4294901760
        %v397 = vsub.f32 %v243, %v396
        %v398 = vand.u32 %v397, 4294901760
        %v399 = vsub.f32 %v397, %v398
        %v400 = vand.u32 %v399, 4294901760
        %401 = vmatpush.msra.mxu0 %v400
        %v402 = vand.u32 %v241, 4294901760
        %v403 = vsub.f32 %v241, %v402
        %v404 = vand.u32 %v403, 4294901760
        %v405 = vsub.f32 %v403, %v404
        %v406 = vand.u32 %v405, 4294901760
        %407 = vmatpush.msra.mxu0 %v406
        %v408 = vand.u32 %v239, 4294901760
        %v409 = vsub.f32 %v239, %v408
        %v410 = vand.u32 %v409, 4294901760
        %v411 = vsub.f32 %v409, %v410
        %v412 = vand.u32 %v411, 4294901760
        %413 = vmatpush.msra.mxu0 %v412
        %v414 = vand.u32 %v237, 4294901760
        %v415 = vsub.f32 %v237, %v414
        %v416 = vand.u32 %v415, 4294901760
        %v417 = vsub.f32 %v415, %v416
        %v418 = vand.u32 %v417, 4294901760
        %419 = vmatpush.msra.mxu0 %v418
        %v420 = vand.u32 %v235, 4294901760
        %v421 = vsub.f32 %v235, %v420
        %v422 = vand.u32 %v421, 4294901760
        %v423 = vsub.f32 %v421, %v422
        %v424 = vand.u32 %v423, 4294901760
        %425 = vmatpush.msra.mxu0 %v424
        %v426 = vand.u32 %v233, 4294901760
        %v427 = vsub.f32 %v233, %v426
        %v428 = vand.u32 %v427, 4294901760
        %v429 = vsub.f32 %v427, %v428
        %v430 = vand.u32 %v429, 4294901760
        %431 = vmatpush.msra.mxu0 %v430
        %v432 = vand.u32 %v231, 4294901760
        %v433 = vsub.f32 %v231, %v432
        %v434 = vand.u32 %v433, 4294901760
        %v435 = vsub.f32 %v433, %v434
        %v436 = vand.u32 %v435, 4294901760
        %437 = vmatpush.msra.mxu0 %v436
        %v438 = vand.u32 %v229, 4294901760
        %v439 = vsub.f32 %v229, %v438
        %v440 = vand.u32 %v439, 4294901760
        %v441 = vsub.f32 %v439, %v440
        %v442 = vand.u32 %v441, 4294901760
        %443 = vmatpush.msra.mxu0 %v442
        %v444 = vand.u32 %v225, 4294901760
        %445 = vmatmul.f32.gmra.mxu0 %v444
        %v446 = vpop.f32.mrf.mxu0
        %v447 = vadd.f32 %v338, %v446
        %v448 = vand.u32 %v227, 4294901760
        %449 = vmatmul.f32.gmra.mxu0 %v448
        %v450 = vpop.f32.mrf.mxu0
        %v451 = vadd.f32 %v346, %v450
        %452 = vdwg.mxu0
        %v453 = vand.u32 %v259, 4294901760
        %v454 = vsub.f32 %v259, %v453
        %455 = vmatpush.msra.mxu0 %v454
        %v456 = vand.u32 %v257, 4294901760
        %v457 = vsub.f32 %v257, %v456
        %458 = vmatpush.msra.mxu0 %v457
        %v459 = vand.u32 %v255, 4294901760
        %v460 = vsub.f32 %v255, %v459
        %461 = vmatpush.msra.mxu0 %v460
        %v462 = vand.u32 %v253, 4294901760
        %v463 = vsub.f32 %v253, %v462
        %464 = vmatpush.msra.mxu0 %v463
        %v465 = vand.u32 %v251, 4294901760
        %v466 = vsub.f32 %v251, %v465
        %467 = vmatpush.msra.mxu0 %v466
        %v468 = vand.u32 %v249, 4294901760
        %v469 = vsub.f32 %v249, %v468
        %470 = vmatpush.msra.mxu0 %v469
        %v471 = vand.u32 %v247, 4294901760
        %v472 = vsub.f32 %v247, %v471
        %473 = vmatpush.msra.mxu0 %v472
        %v474 = vand.u32 %v245, 4294901760
        %v475 = vsub.f32 %v245, %v474
        %476 = vmatpush.msra.mxu0 %v475
        %v477 = vand.u32 %v243, 4294901760
        %v478 = vsub.f32 %v243, %v477
        %479 = vmatpush.msra.mxu0 %v478
        %v480 = vand.u32 %v241, 4294901760
        %v481 = vsub.f32 %v241, %v480
        %482 = vmatpush.msra.mxu0 %v481
        %v483 = vand.u32 %v239, 4294901760
        %v484 = vsub.f32 %v239, %v483
        %485 = vmatpush.msra.mxu0 %v484
        %v486 = vand.u32 %v237, 4294901760
        %v487 = vsub.f32 %v237, %v486
        %488 = vmatpush.msra.mxu0 %v487
        %v489 = vand.u32 %v235, 4294901760
        %v490 = vsub.f32 %v235, %v489
        %491 = vmatpush.msra.mxu0 %v490
        %v492 = vand.u32 %v233, 4294901760
        %v493 = vsub.f32 %v233, %v492
        %494 = vmatpush.msra.mxu0 %v493
        %v495 = vand.u32 %v231, 4294901760
        %v496 = vsub.f32 %v231, %v495
        %497 = vmatpush.msra.mxu0 %v496
        %v498 = vand.u32 %v229, 4294901760
        %v499 = vsub.f32 %v229, %v498
        %500 = vmatpush.msra.mxu0 %v499
        %v501 = vand.u32 %v225, 4294901760
        %v502 = vsub.f32 %v225, %v501
        %503 = vmatmul.f32.gmra.mxu0 %v502
        %v504 = vpop.f32.mrf.mxu0
        %v505 = vadd.f32 %v447, %v504
        %v506 = vand.u32 %v227, 4294901760
        %v507 = vsub.f32 %v227, %v506
        %508 = vmatmul.f32.gmra.mxu0 %v507
        %v509 = vpop.f32.mrf.mxu0
        %v510 = vadd.f32 %v451, %v509
        %511 = vdwg.mxu0
        %v512 = vand.u32 %v259, 4294901760
        %513 = vmatpush.msra.mxu0 %v512
        %v514 = vand.u32 %v257, 4294901760
        %515 = vmatpush.msra.mxu0 %v514
        %v516 = vand.u32 %v255, 4294901760
        %517 = vmatpush.msra.mxu0 %v516
        %v518 = vand.u32 %v253, 4294901760
        %519 = vmatpush.msra.mxu0 %v518
        %v520 = vand.u32 %v251, 4294901760
        %521 = vmatpush.msra.mxu0 %v520
        %v522 = vand.u32 %v249, 4294901760
        %523 = vmatpush.msra.mxu0 %v522
        %v524 = vand.u32 %v247, 4294901760
        %525 = vmatpush.msra.mxu0 %v524
        %v526 = vand.u32 %v245, 4294901760
        %527 = vmatpush.msra.mxu0 %v526
        %v528 = vand.u32 %v243, 4294901760
        %529 = vmatpush.msra.mxu0 %v528
        %v530 = vand.u32 %v241, 4294901760
        %531 = vmatpush.msra.mxu0 %v530
        %v532 = vand.u32 %v239, 4294901760
        %533 = vmatpush.msra.mxu0 %v532
        %v534 = vand.u32 %v237, 4294901760
        %535 = vmatpush.msra.mxu0 %v534
        %v536 = vand.u32 %v235, 4294901760
        %537 = vmatpush.msra.mxu0 %v536
        %v538 = vand.u32 %v233, 4294901760
        %539 = vmatpush.msra.mxu0 %v538
        %v540 = vand.u32 %v231, 4294901760
        %541 = vmatpush.msra.mxu0 %v540
        %v542 = vand.u32 %v229, 4294901760
        %543 = vmatpush.msra.mxu0 %v542
        %v544 = vand.u32 %v225, 4294901760
        %v545 = vsub.f32 %v225, %v544
        %v546 = vand.u32 %v545, 4294901760
        %547 = vmatmul.f32.gmra.mxu0 %v546
        %v548 = vpop.f32.mrf.mxu0
        %v549 = vadd.f32 %v505, %v548
        %v550 = vand.u32 %v227, 4294901760
        %v551 = vsub.f32 %v227, %v550
        %v552 = vand.u32 %v551, 4294901760
        %553 = vmatmul.f32.gmra.mxu0 %v552
        %v554 = vpop.f32.mrf.mxu0
        %v555 = vadd.f32 %v510, %v554
        %556 = vdwg.mxu0
        %v557 = vand.u32 %v259, 4294901760
        %v558 = vsub.f32 %v259, %v557
        %v559 = vand.u32 %v558, 4294901760
        %560 = vmatpush.msra.mxu0 %v559
        %v561 = vand.u32 %v257, 4294901760
        %v562 = vsub.f32 %v257, %v561
        %v563 = vand.u32 %v562, 4294901760
        %564 = vmatpush.msra.mxu0 %v563
        %v565 = vand.u32 %v255, 4294901760
        %v566 = vsub.f32 %v255, %v565
        %v567 = vand.u32 %v566, 4294901760
        %568 = vmatpush.msra.mxu0 %v567
        %v569 = vand.u32 %v253, 4294901760
        %v570 = vsub.f32 %v253, %v569
        %v571 = vand.u32 %v570, 4294901760
        %572 = vmatpush.msra.mxu0 %v571
        %v573 = vand.u32 %v251, 4294901760
        %v574 = vsub.f32 %v251, %v573
        %v575 = vand.u32 %v574, 4294901760
        %576 = vmatpush.msra.mxu0 %v575
        %v577 = vand.u32 %v249, 4294901760
        %v578 = vsub.f32 %v249, %v577
        %v579 = vand.u32 %v578, 4294901760
        %580 = vmatpush.msra.mxu0 %v579
        %v581 = vand.u32 %v247, 4294901760
        %v582 = vsub.f32 %v247, %v581
        %v583 = vand.u32 %v582, 4294901760
        %584 = vmatpush.msra.mxu0 %v583
        %v585 = vand.u32 %v245, 4294901760
        %v586 = vsub.f32 %v245, %v585
        %v587 = vand.u32 %v586, 4294901760
        %588 = vmatpush.msra.mxu0 %v587
        %v589 = vand.u32 %v243, 4294901760
        %v590 = vsub.f32 %v243, %v589
        %v591 = vand.u32 %v590, 4294901760
        %592 = vmatpush.msra.mxu0 %v591
        %v593 = vand.u32 %v241, 4294901760
        %v594 = vsub.f32 %v241, %v593
        %v595 = vand.u32 %v594, 4294901760
        %596 = vmatpush.msra.mxu0 %v595
        %v597 = vand.u32 %v239, 4294901760
        %v598 = vsub.f32 %v239, %v597
        %v599 = vand.u32 %v598, 4294901760
        %600 = vmatpush.msra.mxu0 %v599
        %v601 = vand.u32 %v237, 4294901760
        %v602 = vsub.f32 %v237, %v601
        %v603 = vand.u32 %v602, 4294901760
        %604 = vmatpush.msra.mxu0 %v603
        %v605 = vand.u32 %v235, 4294901760
        %v606 = vsub.f32 %v235, %v605
        %v607 = vand.u32 %v606, 4294901760
        %608 = vmatpush.msra.mxu0 %v607
        %v609 = vand.u32 %v233, 4294901760
        %v610 = vsub.f32 %v233, %v609
        %v611 = vand.u32 %v610, 4294901760
        %612 = vmatpush.msra.mxu0 %v611
        %v613 = vand.u32 %v231, 4294901760
        %v614 = vsub.f32 %v231, %v613
        %v615 = vand.u32 %v614, 4294901760
        %616 = vmatpush.msra.mxu0 %v615
        %v617 = vand.u32 %v229, 4294901760
        %v618 = vsub.f32 %v229, %v617
        %v619 = vand.u32 %v618, 4294901760
        %620 = vmatpush.msra.mxu0 %v619
        %v621 = vand.u32 %v225, 4294901760
        %622 = vmatmul.f32.gmra.mxu0 %v621
        %v623 = vpop.f32.mrf.mxu0
        %v624 = vadd.f32 %v549, %v623
        %v625 = vand.u32 %v227, 4294901760
        %626 = vmatmul.f32.gmra.mxu0 %v625
        %v627 = vpop.f32.mrf.mxu0
        %v628 = vadd.f32 %v555, %v627
        %629 = vdwg.mxu0
        %v630 = vand.u32 %v259, 4294901760
        %631 = vmatpush.msra.mxu0 %v630
        %v632 = vand.u32 %v257, 4294901760
        %633 = vmatpush.msra.mxu0 %v632
        %v634 = vand.u32 %v255, 4294901760
        %635 = vmatpush.msra.mxu0 %v634
        %v636 = vand.u32 %v253, 4294901760
        %637 = vmatpush.msra.mxu0 %v636
        %v638 = vand.u32 %v251, 4294901760
        %639 = vmatpush.msra.mxu0 %v638
        %v640 = vand.u32 %v249, 4294901760
        %641 = vmatpush.msra.mxu0 %v640
        %v642 = vand.u32 %v247, 4294901760
        %643 = vmatpush.msra.mxu0 %v642
        %v644 = vand.u32 %v245, 4294901760
        %645 = vmatpush.msra.mxu0 %v644
        %v646 = vand.u32 %v243, 4294901760
        %647 = vmatpush.msra.mxu0 %v646
        %v648 = vand.u32 %v241, 4294901760
        %649 = vmatpush.msra.mxu0 %v648
        %v650 = vand.u32 %v239, 4294901760
        %651 = vmatpush.msra.mxu0 %v650
        %v652 = vand.u32 %v237, 4294901760
        %653 = vmatpush.msra.mxu0 %v652
        %v654 = vand.u32 %v235, 4294901760
        %655 = vmatpush.msra.mxu0 %v654
        %v656 = vand.u32 %v233, 4294901760
        %657 = vmatpush.msra.mxu0 %v656
        %v658 = vand.u32 %v231, 4294901760
        %659 = vmatpush.msra.mxu0 %v658
        %v660 = vand.u32 %v229, 4294901760
        %661 = vmatpush.msra.mxu0 %v660
        %v662 = vand.u32 %v225, 4294901760
        %663 = vmatmul.f32.gmra.mxu0 %v662
        %v664 = vpop.f32.mrf.mxu0
        %v665 = vadd.f32 %v624, %v664
        %v666 = vand.u32 %v227, 4294901760
        %667 = vmatmul.f32.gmra.mxu0 %v666
        %v668 = vpop.f32.mrf.mxu0
        %v669 = vadd.f32 %v628, %v668
        %670 = vdwg.mxu0
        %v671 = vand.u32 %v291, 4294901760
        %672 = vmatpush.msra.mxu0 %v671
        %v673 = vand.u32 %v289, 4294901760
        %674 = vmatpush.msra.mxu0 %v673
        %v675 = vand.u32 %v287, 4294901760
        %676 = vmatpush.msra.mxu0 %v675
        %v677 = vand.u32 %v285, 4294901760
        %678 = vmatpush.msra.mxu0 %v677
        %v679 = vand.u32 %v283, 4294901760
        %680 = vmatpush.msra.mxu0 %v679
        %v681 = vand.u32 %v281, 4294901760
        %682 = vmatpush.msra.mxu0 %v681
        %v683 = vand.u32 %v279, 4294901760
        %684 = vmatpush.msra.mxu0 %v683
        %v685 = vand.u32 %v277, 4294901760
        %686 = vmatpush.msra.mxu0 %v685
        %v687 = vand.u32 %v275, 4294901760
        %688 = vmatpush.msra.mxu0 %v687
        %v689 = vand.u32 %v273, 4294901760
        %690 = vmatpush.msra.mxu0 %v689
        %v691 = vand.u32 %v271, 4294901760
        %692 = vmatpush.msra.mxu0 %v691
        %v693 = vand.u32 %v269, 4294901760
        %694 = vmatpush.msra.mxu0 %v693
        %v695 = vand.u32 %v267, 4294901760
        %696 = vmatpush.msra.mxu0 %v695
        %v697 = vand.u32 %v265, 4294901760
        %698 = vmatpush.msra.mxu0 %v697
        %v699 = vand.u32 %v263, 4294901760
        %700 = vmatpush.msra.mxu0 %v699
        %v701 = vand.u32 %v261, 4294901760
        %702 = vmatpush.msra.mxu0 %v701
        %v703 = vand.u32 %v226, 4294901760
        %v704 = vsub.f32 %v226, %v703
        %v705 = vand.u32 %v704, 4294901760
        %v706 = vsub.f32 %v704, %v705
        %v707 = vand.u32 %v706, 4294901760
        %708 = vmatmul.f32.gmra.mxu0 %v707
        %v709 = vpop.f32.mrf.mxu0
        %v710 = vadd.f32 %v665, %v709
        %v711 = vand.u32 %v228, 4294901760
        %v712 = vsub.f32 %v228, %v711
        %v713 = vand.u32 %v712, 4294901760
        %v714 = vsub.f32 %v712, %v713
        %v715 = vand.u32 %v714, 4294901760
        %716 = vmatmul.f32.gmra.mxu0 %v715
        %v717 = vpop.f32.mrf.mxu0
        %v718 = vadd.f32 %v669, %v717
        %719 = vdwg.mxu0
        %v720 = vand.u32 %v291, 4294901760
        %v721 = vsub.f32 %v291, %v720
        %v722 = vand.u32 %v721, 4294901760
        %v723 = vsub.f32 %v721, %v722
        %v724 = vand.u32 %v723, 4294901760
        %725 = vmatpush.msra.mxu0 %v724
        %v726 = vand.u32 %v289, 4294901760
        %v727 = vsub.f32 %v289, %v726
        %v728 = vand.u32 %v727, 4294901760
        %v729 = vsub.f32 %v727, %v728
        %v730 = vand.u32 %v729, 4294901760
        %731 = vmatpush.msra.mxu0 %v730
        %v732 = vand.u32 %v287, 4294901760
        %v733 = vsub.f32 %v287, %v732
        %v734 = vand.u32 %v733, 4294901760
        %v735 = vsub.f32 %v733, %v734
        %v736 = vand.u32 %v735, 4294901760
        %737 = vmatpush.msra.mxu0 %v736
        %v738 = vand.u32 %v285, 4294901760
        %v739 = vsub.f32 %v285, %v738
        %v740 = vand.u32 %v739, 4294901760
        %v741 = vsub.f32 %v739, %v740
        %v742 = vand.u32 %v741, 4294901760
        %743 = vmatpush.msra.mxu0 %v742
        %v744 = vand.u32 %v283, 4294901760
        %v745 = vsub.f32 %v283, %v744
        %v746 = vand.u32 %v745, 4294901760
        %v747 = vsub.f32 %v745, %v746
        %v748 = vand.u32 %v747, 4294901760
        %749 = vmatpush.msra.mxu0 %v748
        %v750 = vand.u32 %v281, 4294901760
        %v751 = vsub.f32 %v281, %v750
        %v752 = vand.u32 %v751, 4294901760
        %v753 = vsub.f32 %v751, %v752
        %v754 = vand.u32 %v753, 4294901760
        %755 = vmatpush.msra.mxu0 %v754
        %v756 = vand.u32 %v279, 4294901760
        %v757 = vsub.f32 %v279, %v756
        %v758 = vand.u32 %v757, 4294901760
        %v759 = vsub.f32 %v757, %v758
        %v760 = vand.u32 %v759, 4294901760
        %761 = vmatpush.msra.mxu0 %v760
        %v762 = vand.u32 %v277, 4294901760
        %v763 = vsub.f32 %v277, %v762
        %v764 = vand.u32 %v763, 4294901760
        %v765 = vsub.f32 %v763, %v764
        %v766 = vand.u32 %v765, 4294901760
        %767 = vmatpush.msra.mxu0 %v766
        %v768 = vand.u32 %v275, 4294901760
        %v769 = vsub.f32 %v275, %v768
        %v770 = vand.u32 %v769, 4294901760
        %v771 = vsub.f32 %v769, %v770
        %v772 = vand.u32 %v771, 4294901760
        %773 = vmatpush.msra.mxu0 %v772
        %v774 = vand.u32 %v273, 4294901760
        %v775 = vsub.f32 %v273, %v774
        %v776 = vand.u32 %v775, 4294901760
        %v777 = vsub.f32 %v775, %v776
        %v778 = vand.u32 %v777, 4294901760
        %779 = vmatpush.msra.mxu0 %v778
        %v780 = vand.u32 %v271, 4294901760
        %v781 = vsub.f32 %v271, %v780
        %v782 = vand.u32 %v781, 4294901760
        %v783 = vsub.f32 %v781, %v782
        %v784 = vand.u32 %v783, 4294901760
        %785 = vmatpush.msra.mxu0 %v784
        %v786 = vand.u32 %v269, 4294901760
        %v787 = vsub.f32 %v269, %v786
        %v788 = vand.u32 %v787, 4294901760
        %v789 = vsub.f32 %v787, %v788
        %v790 = vand.u32 %v789, 4294901760
        %791 = vmatpush.msra.mxu0 %v790
        %v792 = vand.u32 %v267, 4294901760
        %v793 = vsub.f32 %v267, %v792
        %v794 = vand.u32 %v793, 4294901760
        %v795 = vsub.f32 %v793, %v794
        %v796 = vand.u32 %v795, 4294901760
        %797 = vmatpush.msra.mxu0 %v796
        %v798 = vand.u32 %v265, 4294901760
        %v799 = vsub.f32 %v265, %v798
        %v800 = vand.u32 %v799, 4294901760
        %v801 = vsub.f32 %v799, %v800
        %v802 = vand.u32 %v801, 4294901760
        %803 = vmatpush.msra.mxu0 %v802
        %v804 = vand.u32 %v263, 4294901760
        %v805 = vsub.f32 %v263, %v804
        %v806 = vand.u32 %v805, 4294901760
        %v807 = vsub.f32 %v805, %v806
        %v808 = vand.u32 %v807, 4294901760
        %809 = vmatpush.msra.mxu0 %v808
        %v810 = vand.u32 %v261, 4294901760
        %v811 = vsub.f32 %v261, %v810
        %v812 = vand.u32 %v811, 4294901760
        %v813 = vsub.f32 %v811, %v812
        %v814 = vand.u32 %v813, 4294901760
        %815 = vmatpush.msra.mxu0 %v814
        %v816 = vand.u32 %v226, 4294901760
        %817 = vmatmul.f32.gmra.mxu0 %v816
        %v818 = vpop.f32.mrf.mxu0
        %v819 = vadd.f32 %v710, %v818
        %v820 = vand.u32 %v228, 4294901760
        %821 = vmatmul.f32.gmra.mxu0 %v820
        %v822 = vpop.f32.mrf.mxu0
        %v823 = vadd.f32 %v718, %v822
        %824 = vdwg.mxu0
        %v825 = vand.u32 %v291, 4294901760
        %v826 = vsub.f32 %v291, %v825
        %827 = vmatpush.msra.mxu0 %v826
        %v828 = vand.u32 %v289, 4294901760
        %v829 = vsub.f32 %v289, %v828
        %830 = vmatpush.msra.mxu0 %v829
        %v831 = vand.u32 %v287, 4294901760
        %v832 = vsub.f32 %v287, %v831
        %833 = vmatpush.msra.mxu0 %v832
        %v834 = vand.u32 %v285, 4294901760
        %v835 = vsub.f32 %v285, %v834
        %836 = vmatpush.msra.mxu0 %v835
        %v837 = vand.u32 %v283, 4294901760
        %v838 = vsub.f32 %v283, %v837
        %839 = vmatpush.msra.mxu0 %v838
        %v840 = vand.u32 %v281, 4294901760
        %v841 = vsub.f32 %v281, %v840
        %842 = vmatpush.msra.mxu0 %v841
        %v843 = vand.u32 %v279, 4294901760
        %v844 = vsub.f32 %v279, %v843
        %845 = vmatpush.msra.mxu0 %v844
        %v846 = vand.u32 %v277, 4294901760
        %v847 = vsub.f32 %v277, %v846
        %848 = vmatpush.msra.mxu0 %v847
        %v849 = vand.u32 %v275, 4294901760
        %v850 = vsub.f32 %v275, %v849
        %851 = vmatpush.msra.mxu0 %v850
        %v852 = vand.u32 %v273, 4294901760
        %v853 = vsub.f32 %v273, %v852
        %854 = vmatpush.msra.mxu0 %v853
        %v855 = vand.u32 %v271, 4294901760
        %v856 = vsub.f32 %v271, %v855
        %857 = vmatpush.msra.mxu0 %v856
        %v858 = vand.u32 %v269, 4294901760
        %v859 = vsub.f32 %v269, %v858
        %860 = vmatpush.msra.mxu0 %v859
        %v861 = vand.u32 %v267, 4294901760
        %v862 = vsub.f32 %v267, %v861
        %863 = vmatpush.msra.mxu0 %v862
        %v864 = vand.u32 %v265, 4294901760
        %v865 = vsub.f32 %v265, %v864
        %866 = vmatpush.msra.mxu0 %v865
        %v867 = vand.u32 %v263, 4294901760
        %v868 = vsub.f32 %v263, %v867
        %869 = vmatpush.msra.mxu0 %v868
        %v870 = vand.u32 %v261, 4294901760
        %v871 = vsub.f32 %v261, %v870
        %872 = vmatpush.msra.mxu0 %v871
        %v873 = vand.u32 %v226, 4294901760
        %v874 = vsub.f32 %v226, %v873
        %875 = vmatmul.f32.gmra.mxu0 %v874
        %v876 = vpop.f32.mrf.mxu0
        %v877 = vadd.f32 %v819, %v876
        %v878 = vand.u32 %v228, 4294901760
        %v879 = vsub.f32 %v228, %v878
        %880 = vmatmul.f32.gmra.mxu0 %v879
        %v881 = vpop.f32.mrf.mxu0
        %v882 = vadd.f32 %v823, %v881
        %883 = vdwg.mxu0
        %v884 = vand.u32 %v291, 4294901760
        %885 = vmatpush.msra.mxu0 %v884
        %v886 = vand.u32 %v289, 4294901760
        %887 = vmatpush.msra.mxu0 %v886
        %v888 = vand.u32 %v287, 4294901760
        %889 = vmatpush.msra.mxu0 %v888
        %v890 = vand.u32 %v285, 4294901760
        %891 = vmatpush.msra.mxu0 %v890
        %v892 = vand.u32 %v283, 4294901760
        %893 = vmatpush.msra.mxu0 %v892
        %v894 = vand.u32 %v281, 4294901760
        %895 = vmatpush.msra.mxu0 %v894
        %v896 = vand.u32 %v279, 4294901760
        %897 = vmatpush.msra.mxu0 %v896
        %v898 = vand.u32 %v277, 4294901760
        %899 = vmatpush.msra.mxu0 %v898
        %v900 = vand.u32 %v275, 4294901760
        %901 = vmatpush.msra.mxu0 %v900
        %v902 = vand.u32 %v273, 4294901760
        %903 = vmatpush.msra.mxu0 %v902
        %v904 = vand.u32 %v271, 4294901760
        %905 = vmatpush.msra.mxu0 %v904
        %v906 = vand.u32 %v269, 4294901760
        %907 = vmatpush.msra.mxu0 %v906
        %v908 = vand.u32 %v267, 4294901760
        %909 = vmatpush.msra.mxu0 %v908
        %v910 = vand.u32 %v265, 4294901760
        %911 = vmatpush.msra.mxu0 %v910
        %v912 = vand.u32 %v263, 4294901760
        %913 = vmatpush.msra.mxu0 %v912
        %v914 = vand.u32 %v261, 4294901760
        %915 = vmatpush.msra.mxu0 %v914
        %v916 = vand.u32 %v226, 4294901760
        %v917 = vsub.f32 %v226, %v916
        %v918 = vand.u32 %v917, 4294901760
        %919 = vmatmul.f32.gmra.mxu0 %v918
        %v920 = vpop.f32.mrf.mxu0
        %v921 = vadd.f32 %v877, %v920
        %v922 = vand.u32 %v228, 4294901760
        %v923 = vsub.f32 %v228, %v922
        %v924 = vand.u32 %v923, 4294901760
        %925 = vmatmul.f32.gmra.mxu0 %v924
        %v926 = vpop.f32.mrf.mxu0
        %v927 = vadd.f32 %v882, %v926
        %928 = vdwg.mxu0
        %v929 = vand.u32 %v291, 4294901760
        %v930 = vsub.f32 %v291, %v929
        %v931 = vand.u32 %v930, 4294901760
        %932 = vmatpush.msra.mxu0 %v931
        %v933 = vand.u32 %v289, 4294901760
        %v934 = vsub.f32 %v289, %v933
        %v935 = vand.u32 %v934, 4294901760
        %936 = vmatpush.msra.mxu0 %v935
        %v937 = vand.u32 %v287, 4294901760
        %v938 = vsub.f32 %v287, %v937
        %v939 = vand.u32 %v938, 4294901760
        %940 = vmatpush.msra.mxu0 %v939
        %v941 = vand.u32 %v285, 4294901760
        %v942 = vsub.f32 %v285, %v941
        %v943 = vand.u32 %v942, 4294901760
        %944 = vmatpush.msra.mxu0 %v943
        %v945 = vand.u32 %v283, 4294901760
        %v946 = vsub.f32 %v283, %v945
        %v947 = vand.u32 %v946, 4294901760
        %948 = vmatpush.msra.mxu0 %v947
        %v949 = vand.u32 %v281, 4294901760
        %v950 = vsub.f32 %v281, %v949
        %v951 = vand.u32 %v950, 4294901760
        %952 = vmatpush.msra.mxu0 %v951
        %v953 = vand.u32 %v279, 4294901760
        %v954 = vsub.f32 %v279, %v953
        %v955 = vand.u32 %v954, 4294901760
        %956 = vmatpush.msra.mxu0 %v955
        %v957 = vand.u32 %v277, 4294901760
        %v958 = vsub.f32 %v277, %v957
        %v959 = vand.u32 %v958, 4294901760
        %960 = vmatpush.msra.mxu0 %v959
        %v961 = vand.u32 %v275, 4294901760
        %v962 = vsub.f32 %v275, %v961
        %v963 = vand.u32 %v962, 4294901760
        %964 = vmatpush.msra.mxu0 %v963
        %v965 = vand.u32 %v273, 4294901760
        %v966 = vsub.f32 %v273, %v965
        %v967 = vand.u32 %v966, 4294901760
        %968 = vmatpush.msra.mxu0 %v967
        %v969 = vand.u32 %v271, 4294901760
        %v970 = vsub.f32 %v271, %v969
        %v971 = vand.u32 %v970, 4294901760
        %972 = vmatpush.msra.mxu0 %v971
        %v973 = vand.u32 %v269, 4294901760
        %v974 = vsub.f32 %v269, %v973
        %v975 = vand.u32 %v974, 4294901760
        %976 = vmatpush.msra.mxu0 %v975
        %v977 = vand.u32 %v267, 4294901760
        %v978 = vsub.f32 %v267, %v977
        %v979 = vand.u32 %v978, 4294901760
        %980 = vmatpush.msra.mxu0 %v979
        %v981 = vand.u32 %v265, 4294901760
        %v982 = vsub.f32 %v265, %v981
        %v983 = vand.u32 %v982, 4294901760
        %984 = vmatpush.msra.mxu0 %v983
        %v985 = vand.u32 %v263, 4294901760
        %v986 = vsub.f32 %v263, %v985
        %v987 = vand.u32 %v986, 4294901760
        %988 = vmatpush.msra.mxu0 %v987
        %v989 = vand.u32 %v261, 4294901760
        %v990 = vsub.f32 %v261, %v989
        %v991 = vand.u32 %v990, 4294901760
        %992 = vmatpush.msra.mxu0 %v991
        %v993 = vand.u32 %v226, 4294901760
        %994 = vmatmul.f32.gmra.mxu0 %v993
        %v995 = vpop.f32.mrf.mxu0
        %v996 = vadd.f32 %v921, %v995
        %v997 = vand.u32 %v228, 4294901760
        %998 = vmatmul.f32.gmra.mxu0 %v997
        %v999 = vpop.f32.mrf.mxu0
        %v1000 = vadd.f32 %v927, %v999
        %1001 = vdwg.mxu0
        %v1002 = vand.u32 %v291, 4294901760
        %1003 = vmatpush.msra.mxu0 %v1002
        %v1004 = vand.u32 %v289, 4294901760
        %1005 = vmatpush.msra.mxu0 %v1004
        %v1006 = vand.u32 %v287, 4294901760
        %1007 = vmatpush.msra.mxu0 %v1006
        %v1008 = vand.u32 %v285, 4294901760
        %1009 = vmatpush.msra.mxu0 %v1008
        %v1010 = vand.u32 %v283, 4294901760
        %1011 = vmatpush.msra.mxu0 %v1010
        %v1012 = vand.u32 %v281, 4294901760
        %1013 = vmatpush.msra.mxu0 %v1012
        %v1014 = vand.u32 %v279, 4294901760
        %1015 = vmatpush.msra.mxu0 %v1014
        %v1016 = vand.u32 %v277, 4294901760
        %1017 = vmatpush.msra.mxu0 %v1016
        %v1018 = vand.u32 %v275, 4294901760
        %1019 = vmatpush.msra.mxu0 %v1018
        %v1020 = vand.u32 %v273, 4294901760
        %1021 = vmatpush.msra.mxu0 %v1020
        %v1022 = vand.u32 %v271, 4294901760
        %1023 = vmatpush.msra.mxu0 %v1022
        %v1024 = vand.u32 %v269, 4294901760
        %1025 = vmatpush.msra.mxu0 %v1024
        %v1026 = vand.u32 %v267, 4294901760
        %1027 = vmatpush.msra.mxu0 %v1026
        %v1028 = vand.u32 %v265, 4294901760
        %1029 = vmatpush.msra.mxu0 %v1028
        %v1030 = vand.u32 %v263, 4294901760
        %1031 = vmatpush.msra.mxu0 %v1030
        %v1032 = vand.u32 %v261, 4294901760
        %1033 = vmatpush.msra.mxu0 %v1032
        %v1034 = vand.u32 %v226, 4294901760
        %1035 = vmatmul.f32.gmra.mxu0 %v1034
        %v1036 = vpop.f32.mrf.mxu0
        %v1037 = vadd.f32 %v996, %v1036
        %v1038 = vand.u32 %v228, 4294901760
        %1039 = vmatmul.f32.gmra.mxu0 %v1038
        %v1040 = vpop.f32.mrf.mxu0
        %v1041 = vadd.f32 %v1000, %v1040
        %1042 = vdwg.mxu0
        %v1043 = vand.u32 %v260, 4294901760
        %1044 = vmatpush.msra.mxu0 %v1043
        %v1045 = vand.u32 %v258, 4294901760
        %1046 = vmatpush.msra.mxu0 %v1045
        %v1047 = vand.u32 %v256, 4294901760
        %1048 = vmatpush.msra.mxu0 %v1047
        %v1049 = vand.u32 %v254, 4294901760
        %1050 = vmatpush.msra.mxu0 %v1049
        %v1051 = vand.u32 %v252, 4294901760
        %1052 = vmatpush.msra.mxu0 %v1051
        %v1053 = vand.u32 %v250, 4294901760
        %1054 = vmatpush.msra.mxu0 %v1053
        %v1055 = vand.u32 %v248, 4294901760
        %1056 = vmatpush.msra.mxu0 %v1055
        %v1057 = vand.u32 %v246, 4294901760
        %1058 = vmatpush.msra.mxu0 %v1057
        %v1059 = vand.u32 %v244, 4294901760
        %1060 = vmatpush.msra.mxu0 %v1059
        %v1061 = vand.u32 %v242, 4294901760
        %1062 = vmatpush.msra.mxu0 %v1061
        %v1063 = vand.u32 %v240, 4294901760
        %1064 = vmatpush.msra.mxu0 %v1063
        %v1065 = vand.u32 %v238, 4294901760
        %1066 = vmatpush.msra.mxu0 %v1065
        %v1067 = vand.u32 %v236, 4294901760
        %1068 = vmatpush.msra.mxu0 %v1067
        %v1069 = vand.u32 %v234, 4294901760
        %1070 = vmatpush.msra.mxu0 %v1069
        %v1071 = vand.u32 %v232, 4294901760
        %1072 = vmatpush.msra.mxu0 %v1071
        %v1073 = vand.u32 %v230, 4294901760
        %1074 = vmatpush.msra.mxu0 %v1073
        %v1075 = vand.u32 %v225, 4294901760
        %v1076 = vsub.f32 %v225, %v1075
        %v1077 = vand.u32 %v1076, 4294901760
        %v1078 = vsub.f32 %v1076, %v1077
        %v1079 = vand.u32 %v1078, 4294901760
        %1080 = vmatmul.f32.gmra.mxu0 %v1079
        %v1081 = vpop.f32.mrf.mxu0
        %v1082 = vadd.f32 %v296, %v1081
        %v1083 = vand.u32 %v227, 4294901760
        %v1084 = vsub.f32 %v227, %v1083
        %v1085 = vand.u32 %v1084, 4294901760
        %v1086 = vsub.f32 %v1084, %v1085
        %v1087 = vand.u32 %v1086, 4294901760
        %1088 = vmatmul.f32.gmra.mxu0 %v1087
        %v1089 = vpop.f32.mrf.mxu0
        %v1090 = vadd.f32 %v296, %v1089
        %1091 = vdwg.mxu0
        %v1092 = vand.u32 %v260, 4294901760
        %v1093 = vsub.f32 %v260, %v1092
        %v1094 = vand.u32 %v1093, 4294901760
        %v1095 = vsub.f32 %v1093, %v1094
        %v1096 = vand.u32 %v1095, 4294901760
        %1097 = vmatpush.msra.mxu0 %v1096
        %v1098 = vand.u32 %v258, 4294901760
        %v1099 = vsub.f32 %v258, %v1098
        %v1100 = vand.u32 %v1099, 4294901760
        %v1101 = vsub.f32 %v1099, %v1100
        %v1102 = vand.u32 %v1101, 4294901760
        %1103 = vmatpush.msra.mxu0 %v1102
        %v1104 = vand.u32 %v256, 4294901760
        %v1105 = vsub.f32 %v256, %v1104
        %v1106 = vand.u32 %v1105, 4294901760
        %v1107 = vsub.f32 %v1105, %v1106
        %v1108 = vand.u32 %v1107, 4294901760
        %1109 = vmatpush.msra.mxu0 %v1108
        %v1110 = vand.u32 %v254, 4294901760
        %v1111 = vsub.f32 %v254, %v1110
        %v1112 = vand.u32 %v1111, 4294901760
        %v1113 = vsub.f32 %v1111, %v1112
        %v1114 = vand.u32 %v1113, 4294901760
        %1115 = vmatpush.msra.mxu0 %v1114
        %v1116 = vand.u32 %v252, 4294901760
        %v1117 = vsub.f32 %v252, %v1116
        %v1118 = vand.u32 %v1117, 4294901760
        %v1119 = vsub.f32 %v1117, %v1118
        %v1120 = vand.u32 %v1119, 4294901760
        %1121 = vmatpush.msra.mxu0 %v1120
        %v1122 = vand.u32 %v250, 4294901760
        %v1123 = vsub.f32 %v250, %v1122
        %v1124 = vand.u32 %v1123, 4294901760
        %v1125 = vsub.f32 %v1123, %v1124
        %v1126 = vand.u32 %v1125, 4294901760
        %1127 = vmatpush.msra.mxu0 %v1126
        %v1128 = vand.u32 %v248, 4294901760
        %v1129 = vsub.f32 %v248, %v1128
        %v1130 = vand.u32 %v1129, 4294901760
        %v1131 = vsub.f32 %v1129, %v1130
        %v1132 = vand.u32 %v1131, 4294901760
        %1133 = vmatpush.msra.mxu0 %v1132
        %v1134 = vand.u32 %v246, 4294901760
        %v1135 = vsub.f32 %v246, %v1134
        %v1136 = vand.u32 %v1135, 4294901760
        %v1137 = vsub.f32 %v1135, %v1136
        %v1138 = vand.u32 %v1137, 4294901760
        %1139 = vmatpush.msra.mxu0 %v1138
        %v1140 = vand.u32 %v244, 4294901760
        %v1141 = vsub.f32 %v244, %v1140
        %v1142 = vand.u32 %v1141, 4294901760
        %v1143 = vsub.f32 %v1141, %v1142
        %v1144 = vand.u32 %v1143, 4294901760
        %1145 = vmatpush.msra.mxu0 %v1144
        %v1146 = vand.u32 %v242, 4294901760
        %v1147 = vsub.f32 %v242, %v1146
        %v1148 = vand.u32 %v1147, 4294901760
        %v1149 = vsub.f32 %v1147, %v1148
        %v1150 = vand.u32 %v1149, 4294901760
        %1151 = vmatpush.msra.mxu0 %v1150
        %v1152 = vand.u32 %v240, 4294901760
        %v1153 = vsub.f32 %v240, %v1152
        %v1154 = vand.u32 %v1153, 4294901760
        %v1155 = vsub.f32 %v1153, %v1154
        %v1156 = vand.u32 %v1155, 4294901760
        %1157 = vmatpush.msra.mxu0 %v1156
        %v1158 = vand.u32 %v238, 4294901760
        %v1159 = vsub.f32 %v238, %v1158
        %v1160 = vand.u32 %v1159, 4294901760
        %v1161 = vsub.f32 %v1159, %v1160
        %v1162 = vand.u32 %v1161, 4294901760
        %1163 = vmatpush.msra.mxu0 %v1162
        %v1164 = vand.u32 %v236, 4294901760
        %v1165 = vsub.f32 %v236, %v1164
        %v1166 = vand.u32 %v1165, 4294901760
        %v1167 = vsub.f32 %v1165, %v1166
        %v1168 = vand.u32 %v1167, 4294901760
        %1169 = vmatpush.msra.mxu0 %v1168
        %v1170 = vand.u32 %v234, 4294901760
        %v1171 = vsub.f32 %v234, %v1170
        %v1172 = vand.u32 %v1171, 4294901760
        %v1173 = vsub.f32 %v1171, %v1172
        %v1174 = vand.u32 %v1173, 4294901760
        %1175 = vmatpush.msra.mxu0 %v1174
        %v1176 = vand.u32 %v232, 4294901760
        %v1177 = vsub.f32 %v232, %v1176
        %v1178 = vand.u32 %v1177, 4294901760
        %v1179 = vsub.f32 %v1177, %v1178
        %v1180 = vand.u32 %v1179, 4294901760
        %1181 = vmatpush.msra.mxu0 %v1180
        %v1182 = vand.u32 %v230, 4294901760
        %v1183 = vsub.f32 %v230, %v1182
        %v1184 = vand.u32 %v1183, 4294901760
        %v1185 = vsub.f32 %v1183, %v1184
        %v1186 = vand.u32 %v1185, 4294901760
        %1187 = vmatpush.msra.mxu0 %v1186
        %v1188 = vand.u32 %v225, 4294901760
        %1189 = vmatmul.f32.gmra.mxu0 %v1188
        %v1190 = vpop.f32.mrf.mxu0
        %v1191 = vadd.f32 %v1082, %v1190
        %v1192 = vand.u32 %v227, 4294901760
        %1193 = vmatmul.f32.gmra.mxu0 %v1192
        %v1194 = vpop.f32.mrf.mxu0
        %v1195 = vadd.f32 %v1090, %v1194
        %1196 = vdwg.mxu0
        %v1197 = vand.u32 %v260, 4294901760
        %v1198 = vsub.f32 %v260, %v1197
        %1199 = vmatpush.msra.mxu0 %v1198
        %v1200 = vand.u32 %v258, 4294901760
        %v1201 = vsub.f32 %v258, %v1200
        %1202 = vmatpush.msra.mxu0 %v1201
        %v1203 = vand.u32 %v256, 4294901760
        %v1204 = vsub.f32 %v256, %v1203
        %1205 = vmatpush.msra.mxu0 %v1204
        %v1206 = vand.u32 %v254, 4294901760
        %v1207 = vsub.f32 %v254, %v1206
        %1208 = vmatpush.msra.mxu0 %v1207
        %v1209 = vand.u32 %v252, 4294901760
        %v1210 = vsub.f32 %v252, %v1209
        %1211 = vmatpush.msra.mxu0 %v1210
        %v1212 = vand.u32 %v250, 4294901760
        %v1213 = vsub.f32 %v250, %v1212
        %1214 = vmatpush.msra.mxu0 %v1213
        %v1215 = vand.u32 %v248, 4294901760
        %v1216 = vsub.f32 %v248, %v1215
        %1217 = vmatpush.msra.mxu0 %v1216
        %v1218 = vand.u32 %v246, 4294901760
        %v1219 = vsub.f32 %v246, %v1218
        %1220 = vmatpush.msra.mxu0 %v1219
        %v1221 = vand.u32 %v244, 4294901760
        %v1222 = vsub.f32 %v244, %v1221
        %1223 = vmatpush.msra.mxu0 %v1222
        %v1224 = vand.u32 %v242, 4294901760
        %v1225 = vsub.f32 %v242, %v1224
        %1226 = vmatpush.msra.mxu0 %v1225
        %v1227 = vand.u32 %v240, 4294901760
        %v1228 = vsub.f32 %v240, %v1227
        %1229 = vmatpush.msra.mxu0 %v1228
        %v1230 = vand.u32 %v238, 4294901760
        %v1231 = vsub.f32 %v238, %v1230
        %1232 = vmatpush.msra.mxu0 %v1231
        %v1233 = vand.u32 %v236, 4294901760
        %v1234 = vsub.f32 %v236, %v1233
        %1235 = vmatpush.msra.mxu0 %v1234
        %v1236 = vand.u32 %v234, 4294901760
        %v1237 = vsub.f32 %v234, %v1236
        %1238 = vmatpush.msra.mxu0 %v1237
        %v1239 = vand.u32 %v232, 4294901760
        %v1240 = vsub.f32 %v232, %v1239
        %1241 = vmatpush.msra.mxu0 %v1240
        %v1242 = vand.u32 %v230, 4294901760
        %v1243 = vsub.f32 %v230, %v1242
        %1244 = vmatpush.msra.mxu0 %v1243
        %v1245 = vand.u32 %v225, 4294901760
        %v1246 = vsub.f32 %v225, %v1245
        %1247 = vmatmul.f32.gmra.mxu0 %v1246
        %v1248 = vpop.f32.mrf.mxu0
        %v1249 = vadd.f32 %v1191, %v1248
        %v1250 = vand.u32 %v227, 4294901760
        %v1251 = vsub.f32 %v227, %v1250
        %1252 = vmatmul.f32.gmra.mxu0 %v1251
        %v1253 = vpop.f32.mrf.mxu0
        %v1254 = vadd.f32 %v1195, %v1253
        %1255 = vdwg.mxu0
        %v1256 = vand.u32 %v260, 4294901760
        %1257 = vmatpush.msra.mxu0 %v1256
        %v1258 = vand.u32 %v258, 4294901760
        %1259 = vmatpush.msra.mxu0 %v1258
        %v1260 = vand.u32 %v256, 4294901760
        %1261 = vmatpush.msra.mxu0 %v1260
        %v1262 = vand.u32 %v254, 4294901760
        %1263 = vmatpush.msra.mxu0 %v1262
        %v1264 = vand.u32 %v252, 4294901760
        %1265 = vmatpush.msra.mxu0 %v1264
        %v1266 = vand.u32 %v250, 4294901760
        %1267 = vmatpush.msra.mxu0 %v1266
        %v1268 = vand.u32 %v248, 4294901760
        %1269 = vmatpush.msra.mxu0 %v1268
        %v1270 = vand.u32 %v246, 4294901760
        %1271 = vmatpush.msra.mxu0 %v1270
        %v1272 = vand.u32 %v244, 4294901760
        %1273 = vmatpush.msra.mxu0 %v1272
        %v1274 = vand.u32 %v242, 4294901760
        %1275 = vmatpush.msra.mxu0 %v1274
        %v1276 = vand.u32 %v240, 4294901760
        %1277 = vmatpush.msra.mxu0 %v1276
        %v1278 = vand.u32 %v238, 4294901760
        %1279 = vmatpush.msra.mxu0 %v1278
        %v1280 = vand.u32 %v236, 4294901760
        %1281 = vmatpush.msra.mxu0 %v1280
        %v1282 = vand.u32 %v234, 4294901760
        %1283 = vmatpush.msra.mxu0 %v1282
        %v1284 = vand.u32 %v232, 4294901760
        %1285 = vmatpush.msra.mxu0 %v1284
        %v1286 = vand.u32 %v230, 4294901760
        %1287 = vmatpush.msra.mxu0 %v1286
        %v1288 = vand.u32 %v225, 4294901760
        %v1289 = vsub.f32 %v225, %v1288
        %v1290 = vand.u32 %v1289, 4294901760
        %1291 = vmatmul.f32.gmra.mxu0 %v1290
        %v1292 = vpop.f32.mrf.mxu0
        %v1293 = vadd.f32 %v1249, %v1292
        %v1294 = vand.u32 %v227, 4294901760
        %v1295 = vsub.f32 %v227, %v1294
        %v1296 = vand.u32 %v1295, 4294901760
        %1297 = vmatmul.f32.gmra.mxu0 %v1296
        %v1298 = vpop.f32.mrf.mxu0
        %v1299 = vadd.f32 %v1254, %v1298
        %1300 = vdwg.mxu0
        %v1301 = vand.u32 %v260, 4294901760
        %v1302 = vsub.f32 %v260, %v1301
        %v1303 = vand.u32 %v1302, 4294901760
        %1304 = vmatpush.msra.mxu0 %v1303
        %v1305 = vand.u32 %v258, 4294901760
        %v1306 = vsub.f32 %v258, %v1305
        %v1307 = vand.u32 %v1306, 4294901760
        %1308 = vmatpush.msra.mxu0 %v1307
        %v1309 = vand.u32 %v256, 4294901760
        %v1310 = vsub.f32 %v256, %v1309
        %v1311 = vand.u32 %v1310, 4294901760
        %1312 = vmatpush.msra.mxu0 %v1311
        %v1313 = vand.u32 %v254, 4294901760
        %v1314 = vsub.f32 %v254, %v1313
        %v1315 = vand.u32 %v1314, 4294901760
        %1316 = vmatpush.msra.mxu0 %v1315
        %v1317 = vand.u32 %v252, 4294901760
        %v1318 = vsub.f32 %v252, %v1317
        %v1319 = vand.u32 %v1318, 4294901760
        %1320 = vmatpush.msra.mxu0 %v1319
        %v1321 = vand.u32 %v250, 4294901760
        %v1322 = vsub.f32 %v250, %v1321
        %v1323 = vand.u32 %v1322, 4294901760
        %1324 = vmatpush.msra.mxu0 %v1323
        %v1325 = vand.u32 %v248, 4294901760
        %v1326 = vsub.f32 %v248, %v1325
        %v1327 = vand.u32 %v1326, 4294901760
        %1328 = vmatpush.msra.mxu0 %v1327
        %v1329 = vand.u32 %v246, 4294901760
        %v1330 = vsub.f32 %v246, %v1329
        %v1331 = vand.u32 %v1330, 4294901760
        %1332 = vmatpush.msra.mxu0 %v1331
        %v1333 = vand.u32 %v244, 4294901760
        %v1334 = vsub.f32 %v244, %v1333
        %v1335 = vand.u32 %v1334, 4294901760
        %1336 = vmatpush.msra.mxu0 %v1335
        %v1337 = vand.u32 %v242, 4294901760
        %v1338 = vsub.f32 %v242, %v1337
        %v1339 = vand.u32 %v1338, 4294901760
        %1340 = vmatpush.msra.mxu0 %v1339
        %v1341 = vand.u32 %v240, 4294901760
        %v1342 = vsub.f32 %v240, %v1341
        %v1343 = vand.u32 %v1342, 4294901760
        %1344 = vmatpush.msra.mxu0 %v1343
        %v1345 = vand.u32 %v238, 4294901760
        %v1346 = vsub.f32 %v238, %v1345
        %v1347 = vand.u32 %v1346, 4294901760
        %1348 = vmatpush.msra.mxu0 %v1347
        %v1349 = vand.u32 %v236, 4294901760
        %v1350 = vsub.f32 %v236, %v1349
        %v1351 = vand.u32 %v1350, 4294901760
        %1352 = vmatpush.msra.mxu0 %v1351
        %v1353 = vand.u32 %v234, 4294901760
        %v1354 = vsub.f32 %v234, %v1353
        %v1355 = vand.u32 %v1354, 4294901760
        %1356 = vmatpush.msra.mxu0 %v1355
        %v1357 = vand.u32 %v232, 4294901760
        %v1358 = vsub.f32 %v232, %v1357
        %v1359 = vand.u32 %v1358, 4294901760
        %1360 = vmatpush.msra.mxu0 %v1359
        %v1361 = vand.u32 %v230, 4294901760
        %v1362 = vsub.f32 %v230, %v1361
        %v1363 = vand.u32 %v1362, 4294901760
        %1364 = vmatpush.msra.mxu0 %v1363
        %v1365 = vand.u32 %v225, 4294901760
        %1366 = vmatmul.f32.gmra.mxu0 %v1365
        %v1367 = vpop.f32.mrf.mxu0
        %v1368 = vadd.f32 %v1293, %v1367
        %v1369 = vand.u32 %v227, 4294901760
        %1370 = vmatmul.f32.gmra.mxu0 %v1369
        %v1371 = vpop.f32.mrf.mxu0
        %v1372 = vadd.f32 %v1299, %v1371
        %1373 = vdwg.mxu0
        %v1374 = vand.u32 %v260, 4294901760
        %1375 = vmatpush.msra.mxu0 %v1374
        %v1376 = vand.u32 %v258, 4294901760
        %1377 = vmatpush.msra.mxu0 %v1376
        %v1378 = vand.u32 %v256, 4294901760
        %1379 = vmatpush.msra.mxu0 %v1378
        %v1380 = vand.u32 %v254, 4294901760
        %1381 = vmatpush.msra.mxu0 %v1380
        %v1382 = vand.u32 %v252, 4294901760
        %1383 = vmatpush.msra.mxu0 %v1382
        %v1384 = vand.u32 %v250, 4294901760
        %1385 = vmatpush.msra.mxu0 %v1384
        %v1386 = vand.u32 %v248, 4294901760
        %1387 = vmatpush.msra.mxu0 %v1386
        %v1388 = vand.u32 %v246, 4294901760
        %1389 = vmatpush.msra.mxu0 %v1388
        %v1390 = vand.u32 %v244, 4294901760
        %1391 = vmatpush.msra.mxu0 %v1390
        %v1392 = vand.u32 %v242, 4294901760
        %1393 = vmatpush.msra.mxu0 %v1392
        %v1394 = vand.u32 %v240, 4294901760
        %1395 = vmatpush.msra.mxu0 %v1394
        %v1396 = vand.u32 %v238, 4294901760
        %1397 = vmatpush.msra.mxu0 %v1396
        %v1398 = vand.u32 %v236, 4294901760
        %1399 = vmatpush.msra.mxu0 %v1398
        %v1400 = vand.u32 %v234, 4294901760
        %1401 = vmatpush.msra.mxu0 %v1400
        %v1402 = vand.u32 %v232, 4294901760
        %1403 = vmatpush.msra.mxu0 %v1402
        %v1404 = vand.u32 %v230, 4294901760
        %1405 = vmatpush.msra.mxu0 %v1404
        %v1406 = vand.u32 %v225, 4294901760
        %1407 = vmatmul.f32.gmra.mxu0 %v1406
        %v1408 = vpop.f32.mrf.mxu0
        %v1409 = vadd.f32 %v1368, %v1408
        %v1410 = vand.u32 %v227, 4294901760
        %1411 = vmatmul.f32.gmra.mxu0 %v1410
        %v1412 = vpop.f32.mrf.mxu0
        %v1413 = vadd.f32 %v1372, %v1412
        %1414 = vdwg.mxu0
        %v1415 = vand.u32 %v292, 4294901760
        %1416 = vmatpush.msra.mxu0 %v1415
        %v1417 = vand.u32 %v290, 4294901760
        %1418 = vmatpush.msra.mxu0 %v1417
        %v1419 = vand.u32 %v288, 4294901760
        %1420 = vmatpush.msra.mxu0 %v1419
        %v1421 = vand.u32 %v286, 4294901760
        %1422 = vmatpush.msra.mxu0 %v1421
        %v1423 = vand.u32 %v284, 4294901760
        %1424 = vmatpush.msra.mxu0 %v1423
        %v1425 = vand.u32 %v282, 4294901760
        %1426 = vmatpush.msra.mxu0 %v1425
        %v1427 = vand.u32 %v280, 4294901760
        %1428 = vmatpush.msra.mxu0 %v1427
        %v1429 = vand.u32 %v278, 4294901760
        %1430 = vmatpush.msra.mxu0 %v1429
        %v1431 = vand.u32 %v276, 4294901760
        %1432 = vmatpush.msra.mxu0 %v1431
        %v1433 = vand.u32 %v274, 4294901760
        %1434 = vmatpush.msra.mxu0 %v1433
        %v1435 = vand.u32 %v272, 4294901760
        %1436 = vmatpush.msra.mxu0 %v1435
        %v1437 = vand.u32 %v270, 4294901760
        %1438 = vmatpush.msra.mxu0 %v1437
        %v1439 = vand.u32 %v268, 4294901760
        %1440 = vmatpush.msra.mxu0 %v1439
        %v1441 = vand.u32 %v266, 4294901760
        %1442 = vmatpush.msra.mxu0 %v1441
        %v1443 = vand.u32 %v264, 4294901760
        %1444 = vmatpush.msra.mxu0 %v1443
        %v1445 = vand.u32 %v262, 4294901760
        %1446 = vmatpush.msra.mxu0 %v1445
        %v1447 = vand.u32 %v226, 4294901760
        %v1448 = vsub.f32 %v226, %v1447
        %v1449 = vand.u32 %v1448, 4294901760
        %v1450 = vsub.f32 %v1448, %v1449
        %v1451 = vand.u32 %v1450, 4294901760
        %1452 = vmatmul.f32.gmra.mxu0 %v1451
        %v1453 = vpop.f32.mrf.mxu0
        %v1454 = vadd.f32 %v1409, %v1453
        %v1455 = vand.u32 %v228, 4294901760
        %v1456 = vsub.f32 %v228, %v1455
        %v1457 = vand.u32 %v1456, 4294901760
        %v1458 = vsub.f32 %v1456, %v1457
        %v1459 = vand.u32 %v1458, 4294901760
        %1460 = vmatmul.f32.gmra.mxu0 %v1459
        %v1461 = vpop.f32.mrf.mxu0
        %v1462 = vadd.f32 %v1413, %v1461
        %1463 = vdwg.mxu0
        %v1464 = vand.u32 %v292, 4294901760
        %v1465 = vsub.f32 %v292, %v1464
        %v1466 = vand.u32 %v1465, 4294901760
        %v1467 = vsub.f32 %v1465, %v1466
        %v1468 = vand.u32 %v1467, 4294901760
        %1469 = vmatpush.msra.mxu0 %v1468
        %v1470 = vand.u32 %v290, 4294901760
        %v1471 = vsub.f32 %v290, %v1470
        %v1472 = vand.u32 %v1471, 4294901760
        %v1473 = vsub.f32 %v1471, %v1472
        %v1474 = vand.u32 %v1473, 4294901760
        %1475 = vmatpush.msra.mxu0 %v1474
        %v1476 = vand.u32 %v288, 4294901760
        %v1477 = vsub.f32 %v288, %v1476
        %v1478 = vand.u32 %v1477, 4294901760
        %v1479 = vsub.f32 %v1477, %v1478
        %v1480 = vand.u32 %v1479, 4294901760
        %1481 = vmatpush.msra.mxu0 %v1480
        %v1482 = vand.u32 %v286, 4294901760
        %v1483 = vsub.f32 %v286, %v1482
        %v1484 = vand.u32 %v1483, 4294901760
        %v1485 = vsub.f32 %v1483, %v1484
        %v1486 = vand.u32 %v1485, 4294901760
        %1487 = vmatpush.msra.mxu0 %v1486
        %v1488 = vand.u32 %v284, 4294901760
        %v1489 = vsub.f32 %v284, %v1488
        %v1490 = vand.u32 %v1489, 4294901760
        %v1491 = vsub.f32 %v1489, %v1490
        %v1492 = vand.u32 %v1491, 4294901760
        %1493 = vmatpush.msra.mxu0 %v1492
        %v1494 = vand.u32 %v282, 4294901760
        %v1495 = vsub.f32 %v282, %v1494
        %v1496 = vand.u32 %v1495, 4294901760
        %v1497 = vsub.f32 %v1495, %v1496
        %v1498 = vand.u32 %v1497, 4294901760
        %1499 = vmatpush.msra.mxu0 %v1498
        %v1500 = vand.u32 %v280, 4294901760
        %v1501 = vsub.f32 %v280, %v1500
        %v1502 = vand.u32 %v1501, 4294901760
        %v1503 = vsub.f32 %v1501, %v1502
        %v1504 = vand.u32 %v1503, 4294901760
        %1505 = vmatpush.msra.mxu0 %v1504
        %v1506 = vand.u32 %v278, 4294901760
        %v1507 = vsub.f32 %v278, %v1506
        %v1508 = vand.u32 %v1507, 4294901760
        %v1509 = vsub.f32 %v1507, %v1508
        %v1510 = vand.u32 %v1509, 4294901760
        %1511 = vmatpush.msra.mxu0 %v1510
        %v1512 = vand.u32 %v276, 4294901760
        %v1513 = vsub.f32 %v276, %v1512
        %v1514 = vand.u32 %v1513, 4294901760
        %v1515 = vsub.f32 %v1513, %v1514
        %v1516 = vand.u32 %v1515, 4294901760
        %1517 = vmatpush.msra.mxu0 %v1516
        %v1518 = vand.u32 %v274, 4294901760
        %v1519 = vsub.f32 %v274, %v1518
        %v1520 = vand.u32 %v1519, 4294901760
        %v1521 = vsub.f32 %v1519, %v1520
        %v1522 = vand.u32 %v1521, 4294901760
        %1523 = vmatpush.msra.mxu0 %v1522
        %v1524 = vand.u32 %v272, 4294901760
        %v1525 = vsub.f32 %v272, %v1524
        %v1526 = vand.u32 %v1525, 4294901760
        %v1527 = vsub.f32 %v1525, %v1526
        %v1528 = vand.u32 %v1527, 4294901760
        %1529 = vmatpush.msra.mxu0 %v1528
        %v1530 = vand.u32 %v270, 4294901760
        %v1531 = vsub.f32 %v270, %v1530
        %v1532 = vand.u32 %v1531, 4294901760
        %v1533 = vsub.f32 %v1531, %v1532
        %v1534 = vand.u32 %v1533, 4294901760
        %1535 = vmatpush.msra.mxu0 %v1534
        %v1536 = vand.u32 %v268, 4294901760
        %v1537 = vsub.f32 %v268, %v1536
        %v1538 = vand.u32 %v1537, 4294901760
        %v1539 = vsub.f32 %v1537, %v1538
        %v1540 = vand.u32 %v1539, 4294901760
        %1541 = vmatpush.msra.mxu0 %v1540
        %v1542 = vand.u32 %v266, 4294901760
        %v1543 = vsub.f32 %v266, %v1542
        %v1544 = vand.u32 %v1543, 4294901760
        %v1545 = vsub.f32 %v1543, %v1544
        %v1546 = vand.u32 %v1545, 4294901760
        %1547 = vmatpush.msra.mxu0 %v1546
        %v1548 = vand.u32 %v264, 4294901760
        %v1549 = vsub.f32 %v264, %v1548
        %v1550 = vand.u32 %v1549, 4294901760
        %v1551 = vsub.f32 %v1549, %v1550
        %v1552 = vand.u32 %v1551, 4294901760
        %1553 = vmatpush.msra.mxu0 %v1552
        %v1554 = vand.u32 %v262, 4294901760
        %v1555 = vsub.f32 %v262, %v1554
        %v1556 = vand.u32 %v1555, 4294901760
        %v1557 = vsub.f32 %v1555, %v1556
        %v1558 = vand.u32 %v1557, 4294901760
        %1559 = vmatpush.msra.mxu0 %v1558
        %v1560 = vand.u32 %v226, 4294901760
        %1561 = vmatmul.f32.gmra.mxu0 %v1560
        %v1562 = vpop.f32.mrf.mxu0
        %v1563 = vadd.f32 %v1454, %v1562
        %v1564 = vand.u32 %v228, 4294901760
        %1565 = vmatmul.f32.gmra.mxu0 %v1564
        %v1566 = vpop.f32.mrf.mxu0
        %v1567 = vadd.f32 %v1462, %v1566
        %1568 = vdwg.mxu0
        %v1569 = vand.u32 %v292, 4294901760
        %v1570 = vsub.f32 %v292, %v1569
        %1571 = vmatpush.msra.mxu0 %v1570
        %v1572 = vand.u32 %v290, 4294901760
        %v1573 = vsub.f32 %v290, %v1572
        %1574 = vmatpush.msra.mxu0 %v1573
        %v1575 = vand.u32 %v288, 4294901760
        %v1576 = vsub.f32 %v288, %v1575
        %1577 = vmatpush.msra.mxu0 %v1576
        %v1578 = vand.u32 %v286, 4294901760
        %v1579 = vsub.f32 %v286, %v1578
        %1580 = vmatpush.msra.mxu0 %v1579
        %v1581 = vand.u32 %v284, 4294901760
        %v1582 = vsub.f32 %v284, %v1581
        %1583 = vmatpush.msra.mxu0 %v1582
        %v1584 = vand.u32 %v282, 4294901760
        %v1585 = vsub.f32 %v282, %v1584
        %1586 = vmatpush.msra.mxu0 %v1585
        %v1587 = vand.u32 %v280, 4294901760
        %v1588 = vsub.f32 %v280, %v1587
        %1589 = vmatpush.msra.mxu0 %v1588
        %v1590 = vand.u32 %v278, 4294901760
        %v1591 = vsub.f32 %v278, %v1590
        %1592 = vmatpush.msra.mxu0 %v1591
        %v1593 = vand.u32 %v276, 4294901760
        %v1594 = vsub.f32 %v276, %v1593
        %1595 = vmatpush.msra.mxu0 %v1594
        %v1596 = vand.u32 %v274, 4294901760
        %v1597 = vsub.f32 %v274, %v1596
        %1598 = vmatpush.msra.mxu0 %v1597
        %v1599 = vand.u32 %v272, 4294901760
        %v1600 = vsub.f32 %v272, %v1599
        %1601 = vmatpush.msra.mxu0 %v1600
        %v1602 = vand.u32 %v270, 4294901760
        %v1603 = vsub.f32 %v270, %v1602
        %1604 = vmatpush.msra.mxu0 %v1603
        %v1605 = vand.u32 %v268, 4294901760
        %v1606 = vsub.f32 %v268, %v1605
        %1607 = vmatpush.msra.mxu0 %v1606
        %v1608 = vand.u32 %v266, 4294901760
        %v1609 = vsub.f32 %v266, %v1608
        %1610 = vmatpush.msra.mxu0 %v1609
        %v1611 = vand.u32 %v264, 4294901760
        %v1612 = vsub.f32 %v264, %v1611
        %1613 = vmatpush.msra.mxu0 %v1612
        %v1614 = vand.u32 %v262, 4294901760
        %v1615 = vsub.f32 %v262, %v1614
        %1616 = vmatpush.msra.mxu0 %v1615
        %v1617 = vand.u32 %v226, 4294901760
        %v1618 = vsub.f32 %v226, %v1617
        %1619 = vmatmul.f32.gmra.mxu0 %v1618
        %v1620 = vpop.f32.mrf.mxu0
        %v1621 = vadd.f32 %v1563, %v1620
        %v1622 = vand.u32 %v228, 4294901760
        %v1623 = vsub.f32 %v228, %v1622
        %1624 = vmatmul.f32.gmra.mxu0 %v1623
        %v1625 = vpop.f32.mrf.mxu0
        %v1626 = vadd.f32 %v1567, %v1625
        %1627 = vdwg.mxu0
        %v1628 = vand.u32 %v292, 4294901760
        %1629 = vmatpush.msra.mxu0 %v1628
        %v1630 = vand.u32 %v290, 4294901760
        %1631 = vmatpush.msra.mxu0 %v1630
        %v1632 = vand.u32 %v288, 4294901760
        %1633 = vmatpush.msra.mxu0 %v1632
        %v1634 = vand.u32 %v286, 4294901760
        %1635 = vmatpush.msra.mxu0 %v1634
        %v1636 = vand.u32 %v284, 4294901760
        %1637 = vmatpush.msra.mxu0 %v1636
        %v1638 = vand.u32 %v282, 4294901760
        %1639 = vmatpush.msra.mxu0 %v1638
        %v1640 = vand.u32 %v280, 4294901760
        %1641 = vmatpush.msra.mxu0 %v1640
        %v1642 = vand.u32 %v278, 4294901760
        %1643 = vmatpush.msra.mxu0 %v1642
        %v1644 = vand.u32 %v276, 4294901760
        %1645 = vmatpush.msra.mxu0 %v1644
        %v1646 = vand.u32 %v274, 4294901760
        %1647 = vmatpush.msra.mxu0 %v1646
        %v1648 = vand.u32 %v272, 4294901760
        %1649 = vmatpush.msra.mxu0 %v1648
        %v1650 = vand.u32 %v270, 4294901760
        %1651 = vmatpush.msra.mxu0 %v1650
        %v1652 = vand.u32 %v268, 4294901760
        %1653 = vmatpush.msra.mxu0 %v1652
        %v1654 = vand.u32 %v266, 4294901760
        %1655 = vmatpush.msra.mxu0 %v1654
        %v1656 = vand.u32 %v264, 4294901760
        %1657 = vmatpush.msra.mxu0 %v1656
        %v1658 = vand.u32 %v262, 4294901760
        %1659 = vmatpush.msra.mxu0 %v1658
        %v1660 = vand.u32 %v226, 4294901760
        %v1661 = vsub.f32 %v226, %v1660
        %v1662 = vand.u32 %v1661, 4294901760
        %1663 = vmatmul.f32.gmra.mxu0 %v1662
        %v1664 = vpop.f32.mrf.mxu0
        %v1665 = vadd.f32 %v1621, %v1664
        %v1666 = vand.u32 %v228, 4294901760
        %v1667 = vsub.f32 %v228, %v1666
        %v1668 = vand.u32 %v1667, 4294901760
        %1669 = vmatmul.f32.gmra.mxu0 %v1668
        %v1670 = vpop.f32.mrf.mxu0
        %v1671 = vadd.f32 %v1626, %v1670
        %1672 = vdwg.mxu0
        %v1673 = vand.u32 %v292, 4294901760
        %v1674 = vsub.f32 %v292, %v1673
        %v1675 = vand.u32 %v1674, 4294901760
        %1676 = vmatpush.msra.mxu0 %v1675
        %v1677 = vand.u32 %v290, 4294901760
        %v1678 = vsub.f32 %v290, %v1677
        %v1679 = vand.u32 %v1678, 4294901760
        %1680 = vmatpush.msra.mxu0 %v1679
        %v1681 = vand.u32 %v288, 4294901760
        %v1682 = vsub.f32 %v288, %v1681
        %v1683 = vand.u32 %v1682, 4294901760
        %1684 = vmatpush.msra.mxu0 %v1683
        %v1685 = vand.u32 %v286, 4294901760
        %v1686 = vsub.f32 %v286, %v1685
        %v1687 = vand.u32 %v1686, 4294901760
        %1688 = vmatpush.msra.mxu0 %v1687
        %v1689 = vand.u32 %v284, 4294901760
        %v1690 = vsub.f32 %v284, %v1689
        %v1691 = vand.u32 %v1690, 4294901760
        %1692 = vmatpush.msra.mxu0 %v1691
        %v1693 = vand.u32 %v282, 4294901760
        %v1694 = vsub.f32 %v282, %v1693
        %v1695 = vand.u32 %v1694, 4294901760
        %1696 = vmatpush.msra.mxu0 %v1695
        %v1697 = vand.u32 %v280, 4294901760
        %v1698 = vsub.f32 %v280, %v1697
        %v1699 = vand.u32 %v1698, 4294901760
        %1700 = vmatpush.msra.mxu0 %v1699
        %v1701 = vand.u32 %v278, 4294901760
        %v1702 = vsub.f32 %v278, %v1701
        %v1703 = vand.u32 %v1702, 4294901760
        %1704 = vmatpush.msra.mxu0 %v1703
        %v1705 = vand.u32 %v276, 4294901760
        %v1706 = vsub.f32 %v276, %v1705
        %v1707 = vand.u32 %v1706, 4294901760
        %1708 = vmatpush.msra.mxu0 %v1707
        %v1709 = vand.u32 %v274, 4294901760
        %v1710 = vsub.f32 %v274, %v1709
        %v1711 = vand.u32 %v1710, 4294901760
        %1712 = vmatpush.msra.mxu0 %v1711
        %v1713 = vand.u32 %v272, 4294901760
        %v1714 = vsub.f32 %v272, %v1713
        %v1715 = vand.u32 %v1714, 4294901760
        %1716 = vmatpush.msra.mxu0 %v1715
        %v1717 = vand.u32 %v270, 4294901760
        %v1718 = vsub.f32 %v270, %v1717
        %v1719 = vand.u32 %v1718, 4294901760
        %1720 = vmatpush.msra.mxu0 %v1719
        %v1721 = vand.u32 %v268, 4294901760
        %v1722 = vsub.f32 %v268, %v1721
        %v1723 = vand.u32 %v1722, 4294901760
        %1724 = vmatpush.msra.mxu0 %v1723
        %v1725 = vand.u32 %v266, 4294901760
        %v1726 = vsub.f32 %v266, %v1725
        %v1727 = vand.u32 %v1726, 4294901760
        %1728 = vmatpush.msra.mxu0 %v1727
        %v1729 = vand.u32 %v264, 4294901760
        %v1730 = vsub.f32 %v264, %v1729
        %v1731 = vand.u32 %v1730, 4294901760
        %1732 = vmatpush.msra.mxu0 %v1731
        %v1733 = vand.u32 %v262, 4294901760
        %v1734 = vsub.f32 %v262, %v1733
        %v1735 = vand.u32 %v1734, 4294901760
        %1736 = vmatpush.msra.mxu0 %v1735
        %v1737 = vand.u32 %v226, 4294901760
        %1738 = vmatmul.f32.gmra.mxu0 %v1737
        %v1739 = vpop.f32.mrf.mxu0
        %v1740 = vadd.f32 %v1665, %v1739
        %v1741 = vand.u32 %v228, 4294901760
        %1742 = vmatmul.f32.gmra.mxu0 %v1741
        %v1743 = vpop.f32.mrf.mxu0
        %v1744 = vadd.f32 %v1671, %v1743
        %1745 = vdwg.mxu0
        %v1746 = vand.u32 %v292, 4294901760
        %1747 = vmatpush.msra.mxu0 %v1746
        %v1748 = vand.u32 %v290, 4294901760
        %1749 = vmatpush.msra.mxu0 %v1748
        %v1750 = vand.u32 %v288, 4294901760
        %1751 = vmatpush.msra.mxu0 %v1750
        %v1752 = vand.u32 %v286, 4294901760
        %1753 = vmatpush.msra.mxu0 %v1752
        %v1754 = vand.u32 %v284, 4294901760
        %1755 = vmatpush.msra.mxu0 %v1754
        %v1756 = vand.u32 %v282, 4294901760
        %1757 = vmatpush.msra.mxu0 %v1756
        %v1758 = vand.u32 %v280, 4294901760
        %1759 = vmatpush.msra.mxu0 %v1758
        %v1760 = vand.u32 %v278, 4294901760
        %1761 = vmatpush.msra.mxu0 %v1760
        %v1762 = vand.u32 %v276, 4294901760
        %1763 = vmatpush.msra.mxu0 %v1762
        %v1764 = vand.u32 %v274, 4294901760
        %1765 = vmatpush.msra.mxu0 %v1764
        %v1766 = vand.u32 %v272, 4294901760
        %1767 = vmatpush.msra.mxu0 %v1766
        %v1768 = vand.u32 %v270, 4294901760
        %1769 = vmatpush.msra.mxu0 %v1768
        %v1770 = vand.u32 %v268, 4294901760
        %1771 = vmatpush.msra.mxu0 %v1770
        %v1772 = vand.u32 %v266, 4294901760
        %1773 = vmatpush.msra.mxu0 %v1772
        %v1774 = vand.u32 %v264, 4294901760
        %1775 = vmatpush.msra.mxu0 %v1774
        %v1776 = vand.u32 %v262, 4294901760
        %1777 = vmatpush.msra.mxu0 %v1776
        %v1778 = vand.u32 %v226, 4294901760
        %1779 = vmatmul.f32.gmra.mxu0 %v1778
        %v1780 = vpop.f32.mrf.mxu0
        %v1781 = vadd.f32 %v1740, %v1780
        %v1782 = vand.u32 %v228, 4294901760
        %1783 = vmatmul.f32.gmra.mxu0 %v1782
        %v1784 = vpop.f32.mrf.mxu0
        %v1785 = vadd.f32 %v1744, %v1784
        %1786 = vdwg.mxu0
        %1787 = vst [vmem:[%s222] sm:$0xff] %v1037
        %1788 = vst [vmem:[%s222 + $0x8] sm:$0xff] %v1781
        %1789 = vst [vmem:[%s222 + $0x10] sm:$0xff] %v1041
        %1790 = vst [vmem:[%s222 + $0x18] sm:$0xff] %v1785
        %s1791 = sand.u32 %s97, 1
        %s1792 = scalar_lea.sflag [#allocation4], %s1791
        %s1793 = sand.u32 %s97, 1
        %s1794 = smul.addr %s1793, 32
        %s1795 = scalar_lea.vmem [#allocation8], %s1794
        // Predicated region
        $region45: #{tpu_custom_call.1} parent=31 // pred_check
          %p1796 = pneg %p107
        $region46: #{tpu_custom_call.1} parent=31 // pred_check_branch
          %1798 = sbr.rel (%p1796) target = $region48
        $region47: #{tpu_custom_call.1} parent=31 // pred_region
          %s1799 = smul.u32 2, %s21
          %1801 = vsyncadd %s1792, 0
          %s1802 = smul.addr %s1799, 2
          %s1803 = smul.addr %s1802, 8
          %s1804 = scalar_lea.hbm %s3, %s1803
          %s1805 = sshll.u32 %s1795, 4
          %s1806 = int_to_ptr.vmem [resolvable:$true] %s1805
          %s1807 = sshll.u32 %s1804, 4
          %s1808 = int_to_ptr.hbm [resolvable:$true] %s1807
          %1813 = dma.vmem_to_hbm [thread:$0]  %s1806, 512, %s1808, %s1792, 256, 256, 16
        $region48: #{tpu_custom_call.1} parent=31 // pred_fallthru
          _
      $region32: #{tpu_custom_call.1} parent=5 // pred_fallthru
        _
      %p1814 = scmp.le.s32.totalorder 2, %s16
      // Predicated region
      $region49: #{tpu_custom_call.1} parent=5 // pred_check
        %p1815 = pneg %p1814
      $region50: #{tpu_custom_call.1} parent=5 // pred_check_branch
        %1817 = sbr.rel (%p1815) target = $region52
      $region51: #{tpu_custom_call.1} parent=5 // pred_region
        %s1818 = ssub.s32 %s16, 2
        // Predicated region
        $region53: #{tpu_custom_call.1} parent=51 // pred_check
          %p1819 = pneg %p113
        $region54: #{tpu_custom_call.1} parent=51 // pred_check_branch
          %1821 = sbr.rel (%p1819) target = $region56
        $region55: #{tpu_custom_call.1} parent=51 // pred_region
          %s1822 = sand.u32 %s98, 1
          %s1823 = scalar_lea.sflag [#allocation4], %s1822
          %s1824 = sand.u32 %s98, 1
          %s1825 = smul.addr %s1824, 32
          %s1826 = scalar_lea.vmem [#allocation8], %s1825
          %1828 = dma.done %s1823, 512
        $region56: #{tpu_custom_call.1} parent=51 // pred_fallthru
          _
      $region52: #{tpu_custom_call.1} parent=5 // pred_fallthru
        _
    $region6: #{tpu_custom_call.1} parent=1 // loop_footer
      %s20 = sadd.s32 1, %s16
    $region7: #{tpu_custom_call.1} parent=1 // loop_footer_branch
      %15 = sbr.rel target = $region3
    $region8: #{tpu_custom_call.1} parent=1 // loop_exit
      _
    %1829 = vsyncpa [#allocation3], 1
    %s1830 = scalar_lea.sflag [#allocation3], 1
    %1831 = vsyncpa %s1830, 1
    %1832 = vsyncpa [#allocation6], 1
    %1833 = vsyncpa [#allocation4], 1
    %s1834 = scalar_lea.sflag [#allocation4], 1
    %1835 = vsyncpa %s1834, 1

</llo_original>
